<compile_context>
chip_gen: v6e
topology: v6e:2x2x1
jax: 0.10.0
libtpu: 0.0.40
codegen_flags: <defaults>
</compile_context>

<pallas_src>
import jax
import jax.numpy as jnp
from jax import lax
from jax.experimental import pallas as pl
from jax.experimental.pallas import tpu as pltpu


# ----------------------------- layout constants ----------------------------- #
KROW = 140          # conv1 row-patch width: 5 kernel rows * 28 input cols
N1   = 512          # conv1 matmul lanes: 2 (pw1) * [16 wq1-slots * 16 ch-slots]
A1L  = 256          # conv1 pooled activation lanes: wq1*16 + c   (12*16 valid)
N2   = 1280         # conv2 matmul lanes: 5 (kh2) * 256
KBLK = 256          # per-kh2 lane block: 2 (pw2) * [4 wq2 * 32 ch-slots]
A2L  = 128          # conv2 pooled activation lanes: wq2*32 + cout (4*32)
NF   = 128          # fc widths: 50 -> 128, 10 -> 128
NEG  = -1e30        # masks padded logit lanes inside log_softmax


# --------------------------------- kernel --------------------------------- #

def _smallnet_kernel(xp_ref, w1_ref, b1_ref, w2_ref, b2_ref,
                     w3_ref, b3_ref, w4_ref, b4_ref, out_ref):
    """Full SmallNet forward for one batch block of BB images."""
    bb = xp_ref.shape[1]

    # ---- conv1 + maxpool(2) + bias + relu: ONE matmul (Toeplitz weights) ----
    # xp rows are ordered (ph1, q1, r1, b); conv1 output row oh1 = 2*(2*r1+q1)+ph1.
    x = xp_ref[...].reshape(32 * bb, KROW)                        # bf16
    y1 = jnp.dot(x, w1_ref[...], preferred_element_type=jnp.float32)  # (32*bb, 512)
    y1 = y1.reshape(2, 2, 8, bb, N1)                              # (ph1, q1, r1, b, :)
    y1 = jnp.maximum(y1[0], y1[1])                                # pool over ph1
    y1 = jnp.maximum(y1[..., :A1L], y1[..., A1L:])                # pool over pw1
    a1 = jnp.maximum(y1 + b1_ref[...], 0.0)                       # (2, 8, bb, 256) f32
    # a1[q1, r1, b, wq1*16 + c] = relu(maxpool(conv1))[b, c, 2*r1+q1, wq1]

    # ---- conv2 + maxpool(2) + bias + relu ----
    y2 = jnp.dot(a1.astype(jnp.bfloat16).reshape(16 * bb, A1L), w2_ref[...],
                 preferred_element_type=jnp.float32)              # (16*bb, 1280)
    y2 = y2.reshape(2, 8, bb, N2)                                 # (q1, r1, b, :)

    def conv2_rows(ph2):
        # sum partial products over the 5 kernel rows; conv1 row 2*hq2+ph2+kh2
        # lives at (q1, r1) = ((ph2+kh2) % 2, hq2 + (ph2+kh2)//2).
        s = None
        for kh2 in range(5):
            u = ph2 + kh2
            piece = y2[u % 2, u // 2: u // 2 + 4, :, kh2 * KBLK:(kh2 + 1) * KBLK]
            s = piece if s is None else s + piece
        return s                                                  # (4, bb, 256)

    m = jnp.maximum(conv2_rows(0), conv2_rows(1))                 # pool over ph2
    m = jnp.maximum(m[..., :A2L], m[..., A2L:])                   # pool over pw2
    a2 = jnp.maximum(m + b2_ref[...], 0.0)                        # (4, bb, 128) f32
    a2 = a2.astype(jnp.bfloat16)
    # a2[hq2, b, wq2*32 + cout] = relu(maxpool(conv2))[b, cout, hq2, wq2]

    # ---- fc1 + relu: flatten folded into 4 accumulated matmuls ----
    h = jnp.dot(a2[0], w3_ref[0], preferred_element_type=jnp.float32)
    for hq2 in range(1, 4):
        h = h + jnp.dot(a2[hq2], w3_ref[hq2], preferred_element_type=jnp.float32)
    h = jnp.maximum(h + b3_ref[...], 0.0)                         # (bb, 128) f32

    # ---- fc2 + log_softmax (padded logit lanes carry a -1e30 bias) ----
    logits = jnp.dot(h.astype(jnp.bfloat16), w4_ref[...],
                     preferred_element_type=jnp.float32) + b4_ref[...]
    mx = jnp.max(logits, axis=-1, keepdims=True)
    sh = logits - mx
    lse = jnp.log(jnp.sum(jnp.exp(sh), axis=-1, keepdims=True))
    out_ref[...] = sh - lse                                       # (bb, 128) f32


# ------------------------------- host glue -------------------------------- #

def _conv1_row_patches(x_nchw, bpad):
    """(B,1,28,28) -> (32, bpad, 140) bf16 row-direction conv1 patches.

    Row index = ph1*16 + q1*8 + r1 (conv1 output row oh1 = 4*r1 + 2*q1 + ph1,
    r1 padded 6->8); lane index = kh*28 + iw.
    """
    bsz = x_nchw.shape[0]
    x2 = x_nchw.reshape(bsz, 28, 28).astype(jnp.float32)
    rows5 = jnp.stack([x2[:, kh:kh + 24, :] for kh in range(5)], axis=1)  # (B,5,24,28)
    xp = rows5.reshape(bsz, 5, 6, 2, 2, 28)          # (b, kh, r1, q1, ph1, iw)
    xp = xp.transpose(4, 3, 2, 0, 1, 5)              # (ph1, q1, r1, b, kh, iw)
    xp = xp.reshape(2, 2, 6, bsz, KROW)
    xp = jnp.pad(xp, ((0, 0), (0, 0), (0, 2), (0, bpad - bsz), (0, 0)))
    return xp.reshape(32, bpad, KROW).astype(jnp.bfloat16)


def _pack_params(params):
    """Build lane-padded Toeplitz / permuted weight matrices (bf16) + f32 biases."""
    f32 = jnp.float32
    conv1_w = params["conv1_w"].astype(f32)     # (10, 1, 5, 5)
    conv2_w = params["conv2_w"].astype(f32)     # (20, 10, 5, 5)

    # conv1: W1T[kh*28 + iw, pw1*256 + wq1*16 + c] = conv1_w[c,0,kh, iw-(2*wq1+pw1)]
    kh = jnp.arange(5).reshape(5, 1, 1, 1, 1)
    kw = jnp.arange(5).reshape(1, 5, 1, 1, 1)
    pw = jnp.arange(2).reshape(1, 1, 2, 1, 1)
    wq = jnp.arange(12).reshape(1, 1, 1, 12, 1)
    c = jnp.arange(10).reshape(1, 1, 1, 1, 10)
    shp = (5, 5, 2, 12, 10)
    rows = jnp.broadcast_to(kh * 28 + 2 * wq + pw + kw, shp).reshape(-1)
    cols = jnp.broadcast_to(pw * 256 + wq * 16 + c, shp).reshape(-1)
    vals = jnp.broadcast_to(
        conv1_w[:, 0].transpose(1, 2, 0).reshape(5, 5, 1, 1, 10), shp).reshape(-1)
    w1t = jnp.zeros((KROW, N1), f32).at[rows, cols].set(vals)

    wq = jnp.arange(12).reshape(12, 1)
    c = jnp.arange(10).reshape(1, 10)
    b1 = jnp.zeros((1, A1L), f32).at[0, (wq * 16 + c).reshape(-1)].set(
        jnp.broadcast_to(params["conv1_b"].astype(f32).reshape(1, 10), (12, 10)).reshape(-1))

    # conv2: W2T[wq1*16+cin, kh2*256 + pw2*128 + wq2*32 + cout]
    #           = conv2_w[cout, cin, kh2, wq1 - (2*wq2+pw2)]
    kh2 = jnp.arange(5).reshape(5, 1, 1, 1, 1, 1)
    kw2 = jnp.arange(5).reshape(1, 5, 1, 1, 1, 1)
    pw2 = jnp.arange(2).reshape(1, 1, 2, 1, 1, 1)
    wq2 = jnp.arange(4).reshape(1, 1, 1, 4, 1, 1)
    cin = jnp.arange(10).reshape(1, 1, 1, 1, 10, 1)
    cout = jnp.arange(20).reshape(1, 1, 1, 1, 1, 20)
    shp2 = (5, 5, 2, 4, 10, 20)
    rows = jnp.broadcast_to((2 * wq2 + pw2 + kw2) * 16 + cin, shp2).reshape(-1)
    cols = jnp.broadcast_to(kh2 * KBLK + pw2 * 128 + wq2 * 32 + cout, shp2).reshape(-1)
    vals = jnp.broadcast_to(
        conv2_w.transpose(2, 3, 1, 0).reshape(5, 5, 1, 1, 10, 20), shp2).reshape(-1)
    w2t = jnp.zeros((A1L, N2), f32).at[rows, cols].set(vals)

    wq2 = jnp.arange(4).reshape(4, 1)
    cout = jnp.arange(20).reshape(1, 20)
    b2 = jnp.zeros((1, A2L), f32).at[0, (wq2 * 32 + cout).reshape(-1)].set(
        jnp.broadcast_to(params["conv2_b"].astype(f32).reshape(1, 20), (4, 20)).reshape(-1))

    # fc1: w3[hq2, wq2*32+cout, j] = fc1_w[j, cout*16 + hq2*4 + wq2]  (NCHW flatten)
    v = params["fc1_w"].astype(f32).reshape(50, 20, 4, 4).transpose(2, 3, 1, 0)  # (hq2,wq2,cout,j)
    w3 = jnp.zeros((4, 4, 32, NF), f32).at[:, :, :20, :50].set(v).reshape(4, A2L, NF)
    b3 = jnp.zeros((1, NF), f32).at[0, :50].set(params["fc1_b"].astype(f32))

    # fc2: padded logit columns get NEG bias so log_softmax ignores them
    w4 = jnp.zeros((NF, NF), f32).at[:50, :10].set(params["fc2_w"].astype(f32).T)
    b4 = jnp.full((1, NF), NEG, f32).at[0, :10].set(params["fc2_b"].astype(f32))

    bf16 = jnp.bfloat16
    return (w1t.astype(bf16), b1, w2t.astype(bf16), b2,
            w3.astype(bf16), b3, w4.astype(bf16), b4)


def smallnet_forward(x_nchw, params, *, block_batch=8):
    assert block_batch % 8 == 0
    bsz = x_nchw.shape[0]
    nblk = -(-bsz // block_batch)
    bpad = nblk * block_batch

    xp = _conv1_row_patches(x_nchw, bpad)
    w1t, b1, w2t, b2, w3, b3, w4, b4 = _pack_params(params)

    out = pl.pallas_call(
        _smallnet_kernel,
        out_shape=jax.ShapeDtypeStruct((bpad, NF), jnp.float32),
        grid=(nblk,),
        in_specs=[
            pl.BlockSpec((32, block_batch, KROW), lambda i: (0, i, 0)),
            pl.BlockSpec((KROW, N1), lambda i: (0, 0)),
            pl.BlockSpec((1, A1L), lambda i: (0, 0)),
            pl.BlockSpec((A1L, N2), lambda i: (0, 0)),
            pl.BlockSpec((1, A2L), lambda i: (0, 0)),
            pl.BlockSpec((4, A2L, NF), lambda i: (0, 0, 0)),
            pl.BlockSpec((1, NF), lambda i: (0, 0)),
            pl.BlockSpec((NF, NF), lambda i: (0, 0)),
            pl.BlockSpec((1, NF), lambda i: (0, 0)),
        ],
        out_specs=pl.BlockSpec((block_batch, NF), lambda i: (i, 0)),
        compiler_params=pltpu.CompilerParams(
            dimension_semantics=("parallel",)),
    )(xp, w1t, b1, w2t, b2, w3, b3, w4, b4)
    return out[:bsz, :10]


# ----------------------- pure-JAX reference (checking) ---------------------- #

def smallnet_reference(x, params):
    prec = lax.Precision.HIGHEST

    def conv2d(inp, w, b):
        y = lax.conv_general_dilated(
            inp, w, (1, 1), "VALID",
            dimension_numbers=("NCHW", "OIHW", "NCHW"), precision=prec)
        return y + b.reshape(1, -1, 1, 1)

    def maxpool2(t):
        return lax.reduce_window(t, -jnp.inf, lax.max,
                                 (1, 1, 2, 2), (1, 1, 2, 2), "VALID")

    h = jnp.maximum(maxpool2(conv2d(x, params["conv1_w"], params["conv1_b"])), 0.0)
    h = jnp.maximum(maxpool2(conv2d(h, params["conv2_w"], params["conv2_b"])), 0.0)
    h = h.reshape(h.shape[0], -1)                       # NCHW flatten -> (B, 320)
    h = jnp.maximum(jnp.dot(h, params["fc1_w"].T, precision=prec) + params["fc1_b"], 0.0)
    logits = jnp.dot(h, params["fc2_w"].T, precision=prec) + params["fc2_b"]
    return logits - jax.scipy.special.logsumexp(logits, axis=1, keepdims=True)


# ------------------------------ params / main ------------------------------ #

def init_params(key):
    ks = jax.random.split(key, 8)

    def u(k, shape, fan_in):
        bound = 1.0 / jnp.sqrt(jnp.float32(fan_in))
        return jax.random.uniform(k, shape, jnp.float32, -bound, bound)

    return {
        "conv1_w": u(ks[0], (10, 1, 5, 5), 1 * 25),
        "conv1_b": u(ks[1], (10,), 1 * 25),
        "conv2_w": u(ks[2], (20, 10, 5, 5), 10 * 25),
        "conv2_b": u(ks[3], (20,), 10 * 25),
        "fc1_w":   u(ks[4], (50, 320), 320),
        "fc1_b":   u(ks[5], (50,), 320),
        "fc2_w":   u(ks[6], (10, 50), 50),
        "fc2_b":   u(ks[7], (10,), 50),
    }


if __name__ == "__main__":
    key = jax.random.PRNGKey(0)
    kx, kp = jax.random.split(key)
    # SmallNet's fc1 (320 = 20*4*4) forces a 28x28 single-channel input (MNIST).
    x = jax.random.normal(kx, (2, 1, 28, 28), dtype=jnp.float32)
    params = init_params(kp)

    out = jax.jit(smallnet_forward)(x, params)
    out = jax.block_until_ready(out)

    ref = jax.block_until_ready(smallnet_reference(x, params))
    if not jnp.allclose(out, ref, atol=3e-2, rtol=3e-2):
        raise AssertionError(
            f"Pallas output mismatch vs reference; max abs diff = "
            f"{float(jnp.max(jnp.abs(out - ref)))}")

    assert out.shape == (2, 10) and out.dtype == jnp.float32
    print("KERNEL_OK")
</pallas_src>

<mosaic_0001>
module attributes {stable_mosaic.version = 11 : i64} {
  func.func @_smallnet_kernel(%arg0: i32, %arg1: memref<32x8x140xbf16, #tpu.memory_space<vmem>>, %arg2: memref<140x512xbf16, #tpu.memory_space<vmem>>, %arg3: memref<1x256xf32, #tpu.memory_space<vmem>>, %arg4: memref<256x1280xbf16, #tpu.memory_space<vmem>>, %arg5: memref<1x128xf32, #tpu.memory_space<vmem>>, %arg6: memref<4x128x128xbf16, #tpu.memory_space<vmem>>, %arg7: memref<1x128xf32, #tpu.memory_space<vmem>>, %arg8: memref<128x128xbf16, #tpu.memory_space<vmem>>, %arg9: memref<1x128xf32, #tpu.memory_space<vmem>>, %arg10: memref<8x128xf32, #tpu.memory_space<vmem>>) attributes {dimension_semantics = [#tpu.dimension_semantics<parallel>], iteration_bounds = array<i64: 1>, scalar_prefetch = 0 : i64, scratch_operands = 0 : i64, tpu.core_type = #tpu.core_type<tc>, window_params = [{transform_indices = @transform_0, window_bounds = array<i64: 32, 8, 140>}, {pipeline_mode = #tpu.pipeline_mode<synchronous>, transform_indices = @transform_1, window_bounds = array<i64: 140, 512>}, {pipeline_mode = #tpu.pipeline_mode<synchronous>, transform_indices = @transform_2, window_bounds = array<i64: 1, 256>}, {pipeline_mode = #tpu.pipeline_mode<synchronous>, transform_indices = @transform_3, window_bounds = array<i64: 256, 1280>}, {pipeline_mode = #tpu.pipeline_mode<synchronous>, transform_indices = @transform_4, window_bounds = array<i64: 1, 128>}, {pipeline_mode = #tpu.pipeline_mode<synchronous>, transform_indices = @transform_5, window_bounds = array<i64: 4, 128, 128>}, {pipeline_mode = #tpu.pipeline_mode<synchronous>, transform_indices = @transform_6, window_bounds = array<i64: 1, 128>}, {pipeline_mode = #tpu.pipeline_mode<synchronous>, transform_indices = @transform_7, window_bounds = array<i64: 128, 128>}, {pipeline_mode = #tpu.pipeline_mode<synchronous>, transform_indices = @transform_8, window_bounds = array<i64: 1, 128>}, {transform_indices = @transform_9, window_bounds = array<i64: 8, 128>}]} {
    %c0 = arith.constant 0 : index
    %c0_0 = arith.constant 0 : index
    %c0_1 = arith.constant 0 : index
    %0 = vector.load %arg1[%c0, %c0_0, %c0_1] : memref<32x8x140xbf16, #tpu.memory_space<vmem>>, vector<32x8x140xbf16>
    %1 = vector.shape_cast %0 : vector<32x8x140xbf16> to vector<256x140xbf16>
    %c0_2 = arith.constant 0 : index
    %c0_3 = arith.constant 0 : index
    %2 = vector.load %arg2[%c0_2, %c0_3] : memref<140x512xbf16, #tpu.memory_space<vmem>>, vector<140x512xbf16>
    %cst = arith.constant dense<0.000000e+00> : vector<256x512xf32>
    %3 = tpu.matmul %1, %2, %cst {dimension_numbers = #tpu.dot_dimension_numbers<[1], [0], [0], [1], [0, 0, 1, 1], [], []>} : vector<256x140xbf16>, vector<140x512xbf16>, vector<256x512xf32> -> vector<256x512xf32>
    %4 = vector.shape_cast %3 : vector<256x512xf32> to vector<2x2x8x8x512xf32>
    %5 = vector.extract_strided_slice %4 {offsets = [0, 0, 0, 0, 0], sizes = [1, 2, 8, 8, 512], strides = [1, 1, 1, 1, 1]} : vector<2x2x8x8x512xf32> to vector<1x2x8x8x512xf32>
    %6 = vector.shape_cast %5 : vector<1x2x8x8x512xf32> to vector<2x8x8x512xf32>
    %7 = vector.extract_strided_slice %4 {offsets = [1, 0, 0, 0, 0], sizes = [1, 2, 8, 8, 512], strides = [1, 1, 1, 1, 1]} : vector<2x2x8x8x512xf32> to vector<1x2x8x8x512xf32>
    %8 = vector.shape_cast %7 : vector<1x2x8x8x512xf32> to vector<2x8x8x512xf32>
    %9 = arith.maximumf %6, %8 : vector<2x8x8x512xf32>
    %10 = vector.extract_strided_slice %9 {offsets = [0, 0, 0, 0], sizes = [2, 8, 8, 256], strides = [1, 1, 1, 1]} : vector<2x8x8x512xf32> to vector<2x8x8x256xf32>
    %11 = vector.extract_strided_slice %9 {offsets = [0, 0, 0, 256], sizes = [2, 8, 8, 256], strides = [1, 1, 1, 1]} : vector<2x8x8x512xf32> to vector<2x8x8x256xf32>
    %12 = arith.maximumf %10, %11 : vector<2x8x8x256xf32>
    %c0_4 = arith.constant 0 : index
    %c0_5 = arith.constant 0 : index
    %13 = vector.load %arg3[%c0_4, %c0_5] : memref<1x256xf32, #tpu.memory_space<vmem>>, vector<1x256xf32>
    %14 = vector.shape_cast %13 : vector<1x256xf32> to vector<1x1x1x256xf32>
    %15 = vector.broadcast %14 : vector<1x1x1x256xf32> to vector<2x8x8x256xf32>
    %16 = arith.addf %12, %15 : vector<2x8x8x256xf32>
    %cst_6 = arith.constant 0.000000e+00 : f32
    %17 = vector.broadcast %cst_6 : f32 to vector<2x8x8x256xf32>
    %18 = arith.maximumf %16, %17 : vector<2x8x8x256xf32>
    %19 = arith.truncf %18 : vector<2x8x8x256xf32> to vector<2x8x8x256xbf16>
    %20 = vector.shape_cast %19 : vector<2x8x8x256xbf16> to vector<128x256xbf16>
    %c0_7 = arith.constant 0 : index
    %c0_8 = arith.constant 0 : index
    %21 = vector.load %arg4[%c0_7, %c0_8] : memref<256x1280xbf16, #tpu.memory_space<vmem>>, vector<256x1280xbf16>
    %cst_9 = arith.constant dense<0.000000e+00> : vector<128x1280xf32>
    %22 = tpu.matmul %20, %21, %cst_9 {dimension_numbers = #tpu.dot_dimension_numbers<[1], [0], [0], [1], [0, 0, 1, 1], [], []>} : vector<128x256xbf16>, vector<256x1280xbf16>, vector<128x1280xf32> -> vector<128x1280xf32>
    %23 = vector.shape_cast %22 : vector<128x1280xf32> to vector<2x8x8x1280xf32>
    %24 = vector.extract_strided_slice %23 {offsets = [0, 0, 0, 0], sizes = [1, 4, 8, 256], strides = [1, 1, 1, 1]} : vector<2x8x8x1280xf32> to vector<1x4x8x256xf32>
    %25 = vector.shape_cast %24 : vector<1x4x8x256xf32> to vector<4x8x256xf32>
    %26 = vector.extract_strided_slice %23 {offsets = [1, 0, 0, 256], sizes = [1, 4, 8, 256], strides = [1, 1, 1, 1]} : vector<2x8x8x1280xf32> to vector<1x4x8x256xf32>
    %27 = vector.shape_cast %26 : vector<1x4x8x256xf32> to vector<4x8x256xf32>
    %28 = arith.addf %25, %27 : vector<4x8x256xf32>
    %29 = vector.extract_strided_slice %23 {offsets = [0, 1, 0, 512], sizes = [1, 4, 8, 256], strides = [1, 1, 1, 1]} : vector<2x8x8x1280xf32> to vector<1x4x8x256xf32>
    %30 = vector.shape_cast %29 : vector<1x4x8x256xf32> to vector<4x8x256xf32>
    %31 = arith.addf %28, %30 : vector<4x8x256xf32>
    %32 = vector.extract_strided_slice %23 {offsets = [1, 1, 0, 768], sizes = [1, 4, 8, 256], strides = [1, 1, 1, 1]} : vector<2x8x8x1280xf32> to vector<1x4x8x256xf32>
    %33 = vector.shape_cast %32 : vector<1x4x8x256xf32> to vector<4x8x256xf32>
    %34 = arith.addf %31, %33 : vector<4x8x256xf32>
    %35 = vector.extract_strided_slice %23 {offsets = [0, 2, 0, 1024], sizes = [1, 4, 8, 256], strides = [1, 1, 1, 1]} : vector<2x8x8x1280xf32> to vector<1x4x8x256xf32>
    %36 = vector.shape_cast %35 : vector<1x4x8x256xf32> to vector<4x8x256xf32>
    %37 = arith.addf %34, %36 : vector<4x8x256xf32>
    %38 = vector.extract_strided_slice %23 {offsets = [1, 0, 0, 0], sizes = [1, 4, 8, 256], strides = [1, 1, 1, 1]} : vector<2x8x8x1280xf32> to vector<1x4x8x256xf32>
    %39 = vector.shape_cast %38 : vector<1x4x8x256xf32> to vector<4x8x256xf32>
    %40 = vector.extract_strided_slice %23 {offsets = [0, 1, 0, 256], sizes = [1, 4, 8, 256], strides = [1, 1, 1, 1]} : vector<2x8x8x1280xf32> to vector<1x4x8x256xf32>
    %41 = vector.shape_cast %40 : vector<1x4x8x256xf32> to vector<4x8x256xf32>
    %42 = arith.addf %39, %41 : vector<4x8x256xf32>
    %43 = vector.extract_strided_slice %23 {offsets = [1, 1, 0, 512], sizes = [1, 4, 8, 256], strides = [1, 1, 1, 1]} : vector<2x8x8x1280xf32> to vector<1x4x8x256xf32>
    %44 = vector.shape_cast %43 : vector<1x4x8x256xf32> to vector<4x8x256xf32>
    %45 = arith.addf %42, %44 : vector<4x8x256xf32>
    %46 = vector.extract_strided_slice %23 {offsets = [0, 2, 0, 768], sizes = [1, 4, 8, 256], strides = [1, 1, 1, 1]} : vector<2x8x8x1280xf32> to vector<1x4x8x256xf32>
    %47 = vector.shape_cast %46 : vector<1x4x8x256xf32> to vector<4x8x256xf32>
    %48 = arith.addf %45, %47 : vector<4x8x256xf32>
    %49 = vector.extract_strided_slice %23 {offsets = [1, 2, 0, 1024], sizes = [1, 4, 8, 256], strides = [1, 1, 1, 1]} : vector<2x8x8x1280xf32> to vector<1x4x8x256xf32>
    %50 = vector.shape_cast %49 : vector<1x4x8x256xf32> to vector<4x8x256xf32>
    %51 = arith.addf %48, %50 : vector<4x8x256xf32>
    %52 = arith.maximumf %37, %51 : vector<4x8x256xf32>
    %53 = vector.extract_strided_slice %52 {offsets = [0, 0, 0], sizes = [4, 8, 128], strides = [1, 1, 1]} : vector<4x8x256xf32> to vector<4x8x128xf32>
    %54 = vector.extract_strided_slice %52 {offsets = [0, 0, 128], sizes = [4, 8, 128], strides = [1, 1, 1]} : vector<4x8x256xf32> to vector<4x8x128xf32>
    %55 = arith.maximumf %53, %54 : vector<4x8x128xf32>
    %c0_10 = arith.constant 0 : index
    %c0_11 = arith.constant 0 : index
    %56 = vector.load %arg5[%c0_10, %c0_11] : memref<1x128xf32, #tpu.memory_space<vmem>>, vector<1x128xf32>
    %57 = vector.shape_cast %56 : vector<1x128xf32> to vector<1x1x128xf32>
    %58 = vector.broadcast %57 : vector<1x1x128xf32> to vector<4x8x128xf32>
    %59 = arith.addf %55, %58 : vector<4x8x128xf32>
    %cst_12 = arith.constant 0.000000e+00 : f32
    %60 = vector.broadcast %cst_12 : f32 to vector<4x8x128xf32>
    %61 = arith.maximumf %59, %60 : vector<4x8x128xf32>
    %62 = arith.truncf %61 : vector<4x8x128xf32> to vector<4x8x128xbf16>
    %63 = vector.extract_strided_slice %62 {offsets = [0, 0, 0], sizes = [1, 8, 128], strides = [1, 1, 1]} : vector<4x8x128xbf16> to vector<1x8x128xbf16>
    %64 = vector.shape_cast %63 : vector<1x8x128xbf16> to vector<8x128xbf16>
    %c0_13 = arith.constant 0 : index
    %c0_14 = arith.constant 0 : index
    %c0_15 = arith.constant 0 : index
    %65 = vector.load %arg6[%c0_13, %c0_14, %c0_15] : memref<4x128x128xbf16, #tpu.memory_space<vmem>>, vector<1x128x128xbf16>
    %66 = vector.shape_cast %65 : vector<1x128x128xbf16> to vector<128x128xbf16>
    %cst_16 = arith.constant dense<0.000000e+00> : vector<8x128xf32>
    %67 = tpu.matmul %64, %66, %cst_16 {dimension_numbers = #tpu.dot_dimension_numbers<[1], [0], [0], [1], [0, 0, 1, 1], [], []>} : vector<8x128xbf16>, vector<128x128xbf16>, vector<8x128xf32> -> vector<8x128xf32>
    %68 = vector.extract_strided_slice %62 {offsets = [1, 0, 0], sizes = [1, 8, 128], strides = [1, 1, 1]} : vector<4x8x128xbf16> to vector<1x8x128xbf16>
    %69 = vector.shape_cast %68 : vector<1x8x128xbf16> to vector<8x128xbf16>
    %c1 = arith.constant 1 : index
    %c0_17 = arith.constant 0 : index
    %c0_18 = arith.constant 0 : index
    %70 = vector.load %arg6[%c1, %c0_17, %c0_18] : memref<4x128x128xbf16, #tpu.memory_space<vmem>>, vector<1x128x128xbf16>
    %71 = vector.shape_cast %70 : vector<1x128x128xbf16> to vector<128x128xbf16>
    %cst_19 = arith.constant dense<0.000000e+00> : vector<8x128xf32>
    %72 = tpu.matmul %69, %71, %cst_19 {dimension_numbers = #tpu.dot_dimension_numbers<[1], [0], [0], [1], [0, 0, 1, 1], [], []>} : vector<8x128xbf16>, vector<128x128xbf16>, vector<8x128xf32> -> vector<8x128xf32>
    %73 = arith.addf %67, %72 : vector<8x128xf32>
    %74 = vector.extract_strided_slice %62 {offsets = [2, 0, 0], sizes = [1, 8, 128], strides = [1, 1, 1]} : vector<4x8x128xbf16> to vector<1x8x128xbf16>
    %75 = vector.shape_cast %74 : vector<1x8x128xbf16> to vector<8x128xbf16>
    %c2 = arith.constant 2 : index
    %c0_20 = arith.constant 0 : index
    %c0_21 = arith.constant 0 : index
    %76 = vector.load %arg6[%c2, %c0_20, %c0_21] : memref<4x128x128xbf16, #tpu.memory_space<vmem>>, vector<1x128x128xbf16>
    %77 = vector.shape_cast %76 : vector<1x128x128xbf16> to vector<128x128xbf16>
    %cst_22 = arith.constant dense<0.000000e+00> : vector<8x128xf32>
    %78 = tpu.matmul %75, %77, %cst_22 {dimension_numbers = #tpu.dot_dimension_numbers<[1], [0], [0], [1], [0, 0, 1, 1], [], []>} : vector<8x128xbf16>, vector<128x128xbf16>, vector<8x128xf32> -> vector<8x128xf32>
    %79 = arith.addf %73, %78 : vector<8x128xf32>
    %80 = vector.extract_strided_slice %62 {offsets = [3, 0, 0], sizes = [1, 8, 128], strides = [1, 1, 1]} : vector<4x8x128xbf16> to vector<1x8x128xbf16>
    %81 = vector.shape_cast %80 : vector<1x8x128xbf16> to vector<8x128xbf16>
    %c3 = arith.constant 3 : index
    %c0_23 = arith.constant 0 : index
    %c0_24 = arith.constant 0 : index
    %82 = vector.load %arg6[%c3, %c0_23, %c0_24] : memref<4x128x128xbf16, #tpu.memory_space<vmem>>, vector<1x128x128xbf16>
    %83 = vector.shape_cast %82 : vector<1x128x128xbf16> to vector<128x128xbf16>
    %cst_25 = arith.constant dense<0.000000e+00> : vector<8x128xf32>
    %84 = tpu.matmul %81, %83, %cst_25 {dimension_numbers = #tpu.dot_dimension_numbers<[1], [0], [0], [1], [0, 0, 1, 1], [], []>} : vector<8x128xbf16>, vector<128x128xbf16>, vector<8x128xf32> -> vector<8x128xf32>
    %85 = arith.addf %79, %84 : vector<8x128xf32>
    %c0_26 = arith.constant 0 : index
    %c0_27 = arith.constant 0 : index
    %86 = vector.load %arg7[%c0_26, %c0_27] : memref<1x128xf32, #tpu.memory_space<vmem>>, vector<1x128xf32>
    %87 = vector.broadcast %86 : vector<1x128xf32> to vector<8x128xf32>
    %88 = arith.addf %85, %87 : vector<8x128xf32>
    %cst_28 = arith.constant 0.000000e+00 : f32
    %89 = vector.broadcast %cst_28 : f32 to vector<8x128xf32>
    %90 = arith.maximumf %88, %89 : vector<8x128xf32>
    %91 = arith.truncf %90 : vector<8x128xf32> to vector<8x128xbf16>
    %c0_29 = arith.constant 0 : index
    %c0_30 = arith.constant 0 : index
    %92 = vector.load %arg8[%c0_29, %c0_30] : memref<128x128xbf16, #tpu.memory_space<vmem>>, vector<128x128xbf16>
    %cst_31 = arith.constant dense<0.000000e+00> : vector<8x128xf32>
    %93 = tpu.matmul %91, %92, %cst_31 {dimension_numbers = #tpu.dot_dimension_numbers<[1], [0], [0], [1], [0, 0, 1, 1], [], []>} : vector<8x128xbf16>, vector<128x128xbf16>, vector<8x128xf32> -> vector<8x128xf32>
    %c0_32 = arith.constant 0 : index
    %c0_33 = arith.constant 0 : index
    %94 = vector.load %arg9[%c0_32, %c0_33] : memref<1x128xf32, #tpu.memory_space<vmem>>, vector<1x128xf32>
    %95 = vector.broadcast %94 : vector<1x128xf32> to vector<8x128xf32>
    %96 = arith.addf %93, %95 : vector<8x128xf32>
    %cst_34 = arith.constant dense<0xFF800000> : vector<8xf32>
    %97 = vector.multi_reduction <maximumf>, %96, %cst_34 [1] : vector<8x128xf32> to vector<8xf32>
    %98 = vector.shape_cast %97 : vector<8xf32> to vector<8x1xf32>
    %99 = vector.broadcast %98 : vector<8x1xf32> to vector<8x128xf32>
    %100 = arith.subf %96, %99 : vector<8x128xf32>
    %101 = math.exp %100 : vector<8x128xf32>
    %cst_35 = arith.constant dense<0.000000e+00> : vector<8xf32>
    %102 = vector.multi_reduction <add>, %101, %cst_35 [1] : vector<8x128xf32> to vector<8xf32>
    %103 = vector.shape_cast %102 : vector<8xf32> to vector<8x1xf32>
    %104 = math.log %103 : vector<8x1xf32>
    %105 = vector.broadcast %104 : vector<8x1xf32> to vector<8x128xf32>
    %106 = arith.subf %100, %105 : vector<8x128xf32>
    %c0_36 = arith.constant 0 : index
    %c0_37 = arith.constant 0 : index
    %107 = vector.load %arg10[%c0_36, %c0_37] : memref<8x128xf32, #tpu.memory_space<vmem>>, vector<8x128xf32>
    tpu.vector_store %arg10[%c0_36, %c0_37], %106 {strides = array<i32>} : memref<8x128xf32, #tpu.memory_space<vmem>>, vector<8x128xf32>,
    return
  }
  func.func @transform_0(%arg0: i32) -> (i32, i32, i32) {
    %c0_i32 = arith.constant 0 : i32
    %c0_i32_0 = arith.constant 0 : i32
    %c0_i32_1 = arith.constant 0 : i32
    return %c0_i32, %arg0, %c0_i32_0 : i32, i32, i32
  }
  func.func @transform_1(%arg0: i32) -> (i32, i32) {
    %c0_i32 = arith.constant 0 : i32
    %c0_i32_0 = arith.constant 0 : i32
    %c0_i32_1 = arith.constant 0 : i32
    return %c0_i32, %c0_i32_0 : i32, i32
  }
  func.func @transform_2(%arg0: i32) -> (i32, i32) {
    %c0_i32 = arith.constant 0 : i32
    %c0_i32_0 = arith.constant 0 : i32
    %c0_i32_1 = arith.constant 0 : i32
    return %c0_i32, %c0_i32_0 : i32, i32
  }
  func.func @transform_3(%arg0: i32) -> (i32, i32) {
    %c0_i32 = arith.constant 0 : i32
    %c0_i32_0 = arith.constant 0 : i32
    %c0_i32_1 = arith.constant 0 : i32
    return %c0_i32, %c0_i32_0 : i32, i32
  }
  func.func @transform_4(%arg0: i32) -> (i32, i32) {
    %c0_i32 = arith.constant 0 : i32
    %c0_i32_0 = arith.constant 0 : i32
    %c0_i32_1 = arith.constant 0 : i32
    return %c0_i32, %c0_i32_0 : i32, i32
  }
  func.func @transform_5(%arg0: i32) -> (i32, i32, i32) {
    %c0_i32 = arith.constant 0 : i32
    %c0_i32_0 = arith.constant 0 : i32
    %c0_i32_1 = arith.constant 0 : i32
    %c0_i32_2 = arith.constant 0 : i32
    return %c0_i32, %c0_i32_0, %c0_i32_1 : i32, i32, i32
  }
  func.func @transform_6(%arg0: i32) -> (i32, i32) {
    %c0_i32 = arith.constant 0 : i32
    %c0_i32_0 = arith.constant 0 : i32
    %c0_i32_1 = arith.constant 0 : i32
    return %c0_i32, %c0_i32_0 : i32, i32
  }
  func.func @transform_7(%arg0: i32) -> (i32, i32) {
    %c0_i32 = arith.constant 0 : i32
    %c0_i32_0 = arith.constant 0 : i32
    %c0_i32_1 = arith.constant 0 : i32
    return %c0_i32, %c0_i32_0 : i32, i32
  }
  func.func @transform_8(%arg0: i32) -> (i32, i32) {
    %c0_i32 = arith.constant 0 : i32
    %c0_i32_0 = arith.constant 0 : i32
    %c0_i32_1 = arith.constant 0 : i32
    return %c0_i32, %c0_i32_0 : i32, i32
  }
  func.func @transform_9(%arg0: i32) -> (i32, i32) {
    %c0_i32 = arith.constant 0 : i32
    %c0_i32_0 = arith.constant 0 : i32
    return %arg0, %c0_i32 : i32, i32
  }
}

</mosaic_0001>

<llo_original>
// kernel: smallnet_forward.1
$region0: #{smallnet_forward.1}
  #allocation0 [shape = 'u32[]', space=smem, size = 0x4, offset = 0x4, fixed_abs, tag = 'smem constant byte address 0x4 - core index']
  #allocation1 [shape = 'u32[144,128]{1,0:T(1,128)}', space=vmem, size = 0x12000, scoped, tag = 'internal scratch']
  %s0 = inlined_call_operand.vmem [shape: bf16[32,8,140], index: 0, kind: input, shape index: {}]
  %s1 = inlined_call_operand.vmem [shape: bf16[140,512], index: 1, kind: input, shape index: {}]
  %s2 = inlined_call_operand.vmem [shape: f32[1,256], index: 2, kind: input, shape index: {}]
  %s3 = inlined_call_operand.vmem [shape: bf16[256,1280], index: 3, kind: input, shape index: {}]
  %s4 = inlined_call_operand.vmem [shape: f32[1,128], index: 4, kind: input, shape index: {}]
  %s5 = inlined_call_operand.vmem [shape: bf16[4,128,128], index: 5, kind: input, shape index: {}]
  %s6 = inlined_call_operand.vmem [shape: f32[1,128], index: 6, kind: input, shape index: {}]
  %s7 = inlined_call_operand.vmem [shape: bf16[128,128], index: 7, kind: input, shape index: {}]
  %s8 = inlined_call_operand.vmem [shape: f32[1,128], index: 8, kind: input, shape index: {}]
  %s9 = inlined_call_operand.vmem [shape: f32[8,128], index: 9, kind: output, shape index: {}]
  %s10 = sld [smem:[#allocation0]]
  $region46: #{smallnet_forward.1} parent=0
    _
  %s12 = ssub.s32 1, %s10
  %s13 = scalar_select 0, %s12, %s10
  // Predicated region
  $region2: #{smallnet_forward.1} parent=0 // pred_check
    _
  $region3: #{smallnet_forward.1} parent=0 // pred_check_branch
    %15 = sbr.rel (0) target = $region5
  $region4: #{smallnet_forward.1} parent=0 // pred_region
    _
  $region5: #{smallnet_forward.1} parent=0 // pred_fallthru
    _
  // Predicated region
  $region6: #{smallnet_forward.1} parent=0 // pred_check
    _
  $region7: #{smallnet_forward.1} parent=0 // pred_check_branch
    %17 = sbr.rel (0) target = $region9
  $region8: #{smallnet_forward.1} parent=0 // pred_region
    _
  $region9: #{smallnet_forward.1} parent=0 // pred_fallthru
    _
  // Predicated region
  $region10: #{smallnet_forward.1} parent=0 // pred_check
    _
  $region11: #{smallnet_forward.1} parent=0 // pred_check_branch
    %19 = sbr.rel (0) target = $region13
  $region12: #{smallnet_forward.1} parent=0 // pred_region
    _
  $region13: #{smallnet_forward.1} parent=0 // pred_fallthru
    _
  // Predicated region
  $region14: #{smallnet_forward.1} parent=0 // pred_check
    _
  $region15: #{smallnet_forward.1} parent=0 // pred_check_branch
    %21 = sbr.rel (0) target = $region17
  $region16: #{smallnet_forward.1} parent=0 // pred_region
    _
  $region17: #{smallnet_forward.1} parent=0 // pred_fallthru
    _
  // Predicated region
  $region18: #{smallnet_forward.1} parent=0 // pred_check
    _
  $region19: #{smallnet_forward.1} parent=0 // pred_check_branch
    %23 = sbr.rel (0) target = $region21
  $region20: #{smallnet_forward.1} parent=0 // pred_region
    _
  $region21: #{smallnet_forward.1} parent=0 // pred_fallthru
    _
  // Predicated region
  $region22: #{smallnet_forward.1} parent=0 // pred_check
    _
  $region23: #{smallnet_forward.1} parent=0 // pred_check_branch
    %25 = sbr.rel (0) target = $region25
  $region24: #{smallnet_forward.1} parent=0 // pred_region
    _
  $region25: #{smallnet_forward.1} parent=0 // pred_fallthru
    _
  // Predicated region
  $region26: #{smallnet_forward.1} parent=0 // pred_check
    _
  $region27: #{smallnet_forward.1} parent=0 // pred_check_branch
    %27 = sbr.rel (0) target = $region29
  $region28: #{smallnet_forward.1} parent=0 // pred_region
    _
  $region29: #{smallnet_forward.1} parent=0 // pred_fallthru
    _
  // Predicated region
  $region30: #{smallnet_forward.1} parent=0 // pred_check
    _
  $region31: #{smallnet_forward.1} parent=0 // pred_check_branch
    %29 = sbr.rel (0) target = $region33
  $region32: #{smallnet_forward.1} parent=0 // pred_region
    _
  $region33: #{smallnet_forward.1} parent=0 // pred_fallthru
    _
  // Predicated region
  $region34: #{smallnet_forward.1} parent=0 // pred_check
    _
  $region35: #{smallnet_forward.1} parent=0 // pred_check_branch
    %31 = sbr.rel (0) target = $region37
  $region36: #{smallnet_forward.1} parent=0 // pred_region
    _
  $region37: #{smallnet_forward.1} parent=0 // pred_fallthru
    _
  %v33 = vld [vmem:[%s0] sm:$0xff]
  %v34 = vld [vmem:[%s0 + $0x8] sm:$0xff]
  %v35 = vld [vmem:[%s0 + $0x10] sm:$0xff]
  %v36 = vld [vmem:[%s0 + $0x18] sm:$0xff]
  %v37 = vld [vmem:[%s0 + $0x20] sm:$0xff]
  %v38 = vld [vmem:[%s0 + $0x28] sm:$0xff]
  %v39 = vld [vmem:[%s0 + $0x30] sm:$0xff]
  %v40 = vld [vmem:[%s0 + $0x38] sm:$0xff]
  %v41 = vld [vmem:[%s0 + $0x40] sm:$0xff]
  %v42 = vld [vmem:[%s0 + $0x48] sm:$0xff]
  %v43 = vld [vmem:[%s0 + $0x50] sm:$0xff]
  %v44 = vld [vmem:[%s0 + $0x58] sm:$0xff]
  %v45 = vld [vmem:[%s0 + $0x60] sm:$0xff]
  %v46 = vld [vmem:[%s0 + $0x68] sm:$0xff]
  %v47 = vld [vmem:[%s0 + $0x70] sm:$0xff]
  %v48 = vld [vmem:[%s0 + $0x78] sm:$0xff]
  %v49 = vld [vmem:[%s0 + $0x80] sm:$0xff]
  %v50 = vld [vmem:[%s0 + $0x88] sm:$0xff]
  %v51 = vld [vmem:[%s0 + $0x90] sm:$0xff]
  %v52 = vld [vmem:[%s0 + $0x98] sm:$0xff]
  %v53 = vld [vmem:[%s0 + $0xa0] sm:$0xff]
  %v54 = vld [vmem:[%s0 + $0xa8] sm:$0xff]
  %v55 = vld [vmem:[%s0 + $0xb0] sm:$0xff]
  %v56 = vld [vmem:[%s0 + $0xb8] sm:$0xff]
  %v57 = vld [vmem:[%s0 + $0xc0] sm:$0xff]
  %v58 = vld [vmem:[%s0 + $0xc8] sm:$0xff]
  %v59 = vld [vmem:[%s0 + $0xd0] sm:$0xff]
  %v60 = vld [vmem:[%s0 + $0xd8] sm:$0xff]
  %v61 = vld [vmem:[%s0 + $0xe0] sm:$0xff]
  %v62 = vld [vmem:[%s0 + $0xe8] sm:$0xff]
  %v63 = vld [vmem:[%s0 + $0xf0] sm:$0xff]
  %v64 = vld [vmem:[%s0 + $0xf8] sm:$0xff]
  %v65 = vld [vmem:[%s1] sm:$0xff]
  %v66 = vld [vmem:[%s1 + $0x8] sm:$0xff]
  %v67 = vld [vmem:[%s1 + $0x10] sm:$0xff]
  %v68 = vld [vmem:[%s1 + $0x18] sm:$0xff]
  %v69 = vld [vmem:[%s1 + $0x20] sm:$0xff]
  %v70 = vld [vmem:[%s1 + $0x28] sm:$0xff]
  %v71 = vld [vmem:[%s1 + $0x30] sm:$0xff]
  %v72 = vld [vmem:[%s1 + $0x38] sm:$0xff]
  %v73 = vld [vmem:[%s1 + $0x40] sm:$0xff]
  %v74 = vld [vmem:[%s1 + $0x48] sm:$0xff]
  %v75 = vld [vmem:[%s1 + $0x50] sm:$0xff]
  %v76 = vld [vmem:[%s1 + $0x58] sm:$0xff]
  %v77 = vld [vmem:[%s1 + $0x60] sm:$0xff]
  %v78 = vld [vmem:[%s1 + $0x68] sm:$0xff]
  %v79 = vld [vmem:[%s1 + $0x70] sm:$0xff]
  %v80 = vld [vmem:[%s1 + $0x78] sm:$0xff]
  %v81 = vld [vmem:[%s1 + $0x80] sm:$0xff]
  %v82 = vld [vmem:[%s1 + $0x88] sm:$0xff]
  %v83 = vld [vmem:[%s1 + $0x90] sm:$0xff]
  %v84 = vld [vmem:[%s1 + $0x98] sm:$0xff]
  %v85 = vld [vmem:[%s1 + $0xa0] sm:$0xff]
  %v86 = vld [vmem:[%s1 + $0xa8] sm:$0xff]
  %v87 = vld [vmem:[%s1 + $0xb0] sm:$0xff]
  %v88 = vld [vmem:[%s1 + $0xb8] sm:$0xff]
  %v89 = vld [vmem:[%s1 + $0xc0] sm:$0xff]
  %v90 = vld [vmem:[%s1 + $0xc8] sm:$0xff]
  %v91 = vld [vmem:[%s1 + $0xd0] sm:$0xff]
  %v92 = vld [vmem:[%s1 + $0xd8] sm:$0xff]
  %v93 = vld [vmem:[%s1 + $0xe0] sm:$0xff]
  %v94 = vld [vmem:[%s1 + $0xe8] sm:$0xff]
  %v95 = vld [vmem:[%s1 + $0xf0] sm:$0xff]
  %v96 = vld [vmem:[%s1 + $0xf8] sm:$0xff]
  %v97 = vld [vmem:[%s1 + $0x100] sm:$0xff]
  %v98 = vld [vmem:[%s1 + $0x108] sm:$0xff]
  %v99 = vld [vmem:[%s1 + $0x110] sm:$0x33]
  %v100 = vld [vmem:[%s1 + $0x118] sm:$0x33]
  %v133 = vunpack.c.l.b16 %v33
  %v134 = vunpack.c.h.b16 %v33
  %v135 = vunpack.c.l.b16 %v34
  %v136 = vunpack.c.h.b16 %v34
  %v137 = vunpack.c.l.b16 %v35
  %v138 = vunpack.c.h.b16 %v35
  %v139 = vunpack.c.l.b16 %v36
  %v140 = vunpack.c.h.b16 %v36
  %v141 = vunpack.c.l.b16 %v37
  %v142 = vunpack.c.h.b16 %v37
  %v143 = vunpack.c.l.b16 %v38
  %v144 = vunpack.c.h.b16 %v38
  %v145 = vunpack.c.l.b16 %v39
  %v146 = vunpack.c.h.b16 %v39
  %v147 = vunpack.c.l.b16 %v40
  %v148 = vunpack.c.h.b16 %v40
  %v149 = vunpack.c.l.b16 %v41
  %v150 = vunpack.c.h.b16 %v41
  %v151 = vunpack.c.l.b16 %v42
  %v152 = vunpack.c.h.b16 %v42
  %v153 = vunpack.c.l.b16 %v43
  %v154 = vunpack.c.h.b16 %v43
  %v155 = vunpack.c.l.b16 %v44
  %v156 = vunpack.c.h.b16 %v44
  %v157 = vunpack.c.l.b16 %v45
  %v158 = vunpack.c.h.b16 %v45
  %v159 = vunpack.c.l.b16 %v46
  %v160 = vunpack.c.h.b16 %v46
  %v161 = vunpack.c.l.b16 %v47
  %v162 = vunpack.c.h.b16 %v47
  %v163 = vunpack.c.l.b16 %v48
  %v164 = vunpack.c.h.b16 %v48
  %v165 = vunpack.c.l.b16 %v49
  %v166 = vunpack.c.h.b16 %v49
  %v167 = vunpack.c.l.b16 %v50
  %v168 = vunpack.c.h.b16 %v50
  %v169 = vunpack.c.l.b16 %v51
  %v170 = vunpack.c.h.b16 %v51
  %v171 = vunpack.c.l.b16 %v52
  %v172 = vunpack.c.h.b16 %v52
  %v173 = vunpack.c.l.b16 %v53
  %v174 = vunpack.c.h.b16 %v53
  %v175 = vunpack.c.l.b16 %v54
  %v176 = vunpack.c.h.b16 %v54
  %v177 = vunpack.c.l.b16 %v55
  %v178 = vunpack.c.h.b16 %v55
  %v179 = vunpack.c.l.b16 %v56
  %v180 = vunpack.c.h.b16 %v56
  %v181 = vunpack.c.l.b16 %v57
  %v182 = vunpack.c.h.b16 %v57
  %v183 = vunpack.c.l.b16 %v58
  %v184 = vunpack.c.h.b16 %v58
  %v185 = vunpack.c.l.b16 %v59
  %v186 = vunpack.c.h.b16 %v59
  %v187 = vunpack.c.l.b16 %v60
  %v188 = vunpack.c.h.b16 %v60
  %v189 = vunpack.c.l.b16 %v61
  %v190 = vunpack.c.h.b16 %v61
  %v191 = vunpack.c.l.b16 %v62
  %v192 = vunpack.c.h.b16 %v62
  %v193 = vunpack.c.l.b16 %v63
  %v194 = vunpack.c.h.b16 %v63
  %v195 = vunpack.c.l.b16 %v64
  %v196 = vunpack.c.h.b16 %v64
  %v197 = vpack.c.b16 %v135, %v133
  %v198 = vpack.c.b16 %v136, %v134
  %v199 = vpack.c.b16 %v139, %v137
  %v200 = vpack.c.b16 %v140, %v138
  %v201 = vpack.c.b16 %v143, %v141
  %v202 = vpack.c.b16 %v144, %v142
  %v203 = vpack.c.b16 %v147, %v145
  %v204 = vpack.c.b16 %v148, %v146
  %v205 = vpack.c.b16 %v151, %v149
  %v206 = vpack.c.b16 %v152, %v150
  %v207 = vpack.c.b16 %v155, %v153
  %v208 = vpack.c.b16 %v156, %v154
  %v209 = vpack.c.b16 %v159, %v157
  %v210 = vpack.c.b16 %v160, %v158
  %v211 = vpack.c.b16 %v163, %v161
  %v212 = vpack.c.b16 %v164, %v162
  %v213 = vpack.c.b16 %v167, %v165
  %v214 = vpack.c.b16 %v168, %v166
  %v215 = vpack.c.b16 %v171, %v169
  %v216 = vpack.c.b16 %v172, %v170
  %v217 = vpack.c.b16 %v175, %v173
  %v218 = vpack.c.b16 %v176, %v174
  %v219 = vpack.c.b16 %v179, %v177
  %v220 = vpack.c.b16 %v180, %v178
  %v221 = vpack.c.b16 %v183, %v181
  %v222 = vpack.c.b16 %v184, %v182
  %v223 = vpack.c.b16 %v187, %v185
  %v224 = vpack.c.b16 %v188, %v186
  %v225 = vpack.c.b16 %v191, %v189
  %v226 = vpack.c.b16 %v192, %v190
  %v227 = vpack.c.b16 %v195, %v193
  %v228 = vpack.c.b16 %v196, %v194
  %v281 = vunpack.c.l.b16 %v65
  %v282 = vunpack.c.h.b16 %v65
  %v283 = vunpack.c.l.b16 %v66
  %v284 = vunpack.c.h.b16 %v66
  %v285 = vunpack.c.l.b16 %v67
  %v286 = vunpack.c.h.b16 %v67
  %v287 = vunpack.c.l.b16 %v68
  %v288 = vunpack.c.h.b16 %v68
  %v289 = vunpack.c.l.b16 %v69
  %v290 = vunpack.c.h.b16 %v69
  %v291 = vunpack.c.l.b16 %v70
  %v292 = vunpack.c.h.b16 %v70
  %v293 = vunpack.c.l.b16 %v71
  %v294 = vunpack.c.h.b16 %v71
  %v295 = vunpack.c.l.b16 %v72
  %v296 = vunpack.c.h.b16 %v72
  %v297 = vunpack.c.l.b16 %v73
  %v298 = vunpack.c.h.b16 %v73
  %v299 = vunpack.c.l.b16 %v74
  %v300 = vunpack.c.h.b16 %v74
  %v301 = vunpack.c.l.b16 %v75
  %v302 = vunpack.c.h.b16 %v75
  %v303 = vunpack.c.l.b16 %v76
  %v304 = vunpack.c.h.b16 %v76
  %v305 = vunpack.c.l.b16 %v77
  %v306 = vunpack.c.h.b16 %v77
  %v307 = vunpack.c.l.b16 %v78
  %v308 = vunpack.c.h.b16 %v78
  %v309 = vunpack.c.l.b16 %v79
  %v310 = vunpack.c.h.b16 %v79
  %v311 = vunpack.c.l.b16 %v80
  %v312 = vunpack.c.h.b16 %v80
  %v313 = vunpack.c.l.b16 %v81
  %v314 = vunpack.c.h.b16 %v81
  %v315 = vunpack.c.l.b16 %v82
  %v316 = vunpack.c.h.b16 %v82
  %v317 = vunpack.c.l.b16 %v83
  %v318 = vunpack.c.h.b16 %v83
  %v319 = vunpack.c.l.b16 %v84
  %v320 = vunpack.c.h.b16 %v84
  %v321 = vunpack.c.l.b16 %v85
  %v322 = vunpack.c.h.b16 %v85
  %v323 = vunpack.c.l.b16 %v86
  %v324 = vunpack.c.h.b16 %v86
  %v325 = vunpack.c.l.b16 %v87
  %v326 = vunpack.c.h.b16 %v87
  %v327 = vunpack.c.l.b16 %v88
  %v328 = vunpack.c.h.b16 %v88
  %v329 = vunpack.c.l.b16 %v89
  %v330 = vunpack.c.h.b16 %v89
  %v331 = vunpack.c.l.b16 %v90
  %v332 = vunpack.c.h.b16 %v90
  %v333 = vunpack.c.l.b16 %v91
  %v334 = vunpack.c.h.b16 %v91
  %v335 = vunpack.c.l.b16 %v92
  %v336 = vunpack.c.h.b16 %v92
  %v337 = vunpack.c.l.b16 %v93
  %v338 = vunpack.c.h.b16 %v93
  %v339 = vunpack.c.l.b16 %v94
  %v340 = vunpack.c.h.b16 %v94
  %v341 = vunpack.c.l.b16 %v95
  %v342 = vunpack.c.h.b16 %v95
  %v343 = vunpack.c.l.b16 %v96
  %v344 = vunpack.c.h.b16 %v96
  %v345 = vunpack.c.l.b16 %v97
  %v346 = vunpack.c.h.b16 %v97
  %v347 = vunpack.c.l.b16 %v98
  %v348 = vunpack.c.h.b16 %v98
  %v349 = vunpack.c.l.b16 %v99
  %v350 = vunpack.c.h.b16 %v99
  %v351 = vunpack.c.l.b16 %v100
  %v352 = vunpack.c.h.b16 %v100
  %v353 = vpack.c.b16 %v285, %v281
  %v354 = vpack.c.b16 %v286, %v282
  %v355 = vpack.c.b16 %v287, %v283
  %v356 = vpack.c.b16 %v288, %v284
  %v357 = vpack.c.b16 %v293, %v289
  %v358 = vpack.c.b16 %v294, %v290
  %v359 = vpack.c.b16 %v295, %v291
  %v360 = vpack.c.b16 %v296, %v292
  %v361 = vpack.c.b16 %v301, %v297
  %v362 = vpack.c.b16 %v302, %v298
  %v363 = vpack.c.b16 %v303, %v299
  %v364 = vpack.c.b16 %v304, %v300
  %v365 = vpack.c.b16 %v309, %v305
  %v366 = vpack.c.b16 %v310, %v306
  %v367 = vpack.c.b16 %v311, %v307
  %v368 = vpack.c.b16 %v312, %v308
  %v369 = vpack.c.b16 %v317, %v313
  %v370 = vpack.c.b16 %v318, %v314
  %v371 = vpack.c.b16 %v319, %v315
  %v372 = vpack.c.b16 %v320, %v316
  %v373 = vpack.c.b16 %v325, %v321
  %v374 = vpack.c.b16 %v326, %v322
  %v375 = vpack.c.b16 %v327, %v323
  %v376 = vpack.c.b16 %v328, %v324
  %v377 = vpack.c.b16 %v333, %v329
  %v378 = vpack.c.b16 %v334, %v330
  %v379 = vpack.c.b16 %v335, %v331
  %v380 = vpack.c.b16 %v336, %v332
  %v381 = vpack.c.b16 %v341, %v337
  %v382 = vpack.c.b16 %v342, %v338
  %v383 = vpack.c.b16 %v343, %v339
  %v384 = vpack.c.b16 %v344, %v340
  %v385 = vpack.c.b16 %v349, %v345
  %v386 = vpack.c.b16 %v350, %v346
  %v387 = vpack.c.b16 %v351, %v347
  %v388 = vpack.c.b16 %v352, %v348
  %vm421 = vcmask 97280
  %v423 = vsel %vm421, %v198, 0
  %v426 = vsel %vm421, %v200, 0
  %v429 = vsel %vm421, %v202, 0
  %v432 = vsel %vm421, %v204, 0
  %v435 = vsel %vm421, %v206, 0
  %v438 = vsel %vm421, %v208, 0
  %v441 = vsel %vm421, %v210, 0
  %v444 = vsel %vm421, %v212, 0
  %v447 = vsel %vm421, %v214, 0
  %v450 = vsel %vm421, %v216, 0
  %v453 = vsel %vm421, %v218, 0
  %v456 = vsel %vm421, %v220, 0
  %v459 = vsel %vm421, %v222, 0
  %v462 = vsel %vm421, %v224, 0
  %v465 = vsel %vm421, %v226, 0
  %v468 = vsel %vm421, %v228, 0
  %vm470 = vcmask 1045504
  %v472 = vsel %vm470, %v385, 0
  %v475 = vsel %vm470, %v386, 0
  %v478 = vsel %vm470, %v387, 0
  %v481 = vsel %vm470, %v388, 0
  %483 = vmatprep.subr.bf16.mxu0 %v382
  %484 = vmatpush1.bf16.msra.mxu0 %v381
  %485 = vmatprep.subr.bf16.mxu0 %v378
  %486 = vmatpush1.bf16.msra.mxu0 %v377
  %487 = vmatprep.subr.bf16.mxu0 %v374
  %488 = vmatpush1.bf16.msra.mxu0 %v373
  %489 = vmatprep.subr.bf16.mxu0 %v370
  %490 = vmatpush1.bf16.msra.mxu0 %v369
  %491 = vmatprep.subr.bf16.mxu0 %v366
  %492 = vmatpush1.bf16.msra.mxu0 %v365
  %493 = vmatprep.subr.bf16.mxu0 %v362
  %494 = vmatpush1.bf16.msra.mxu0 %v361
  %495 = vmatprep.subr.bf16.mxu0 %v358
  %496 = vmatpush1.bf16.msra.mxu0 %v357
  %497 = vmatprep.subr.bf16.mxu0 %v354
  %498 = vmatpush1.bf16.msra.mxu0 %v353
  %499 = vmatprep.subr.bf16.mxu0 0
  %500 = vmatpush2.bf16.msra.mxu0 0
  %501 = vmatprep.subr.bf16.mxu0 0
  %502 = vmatpush2.bf16.msra.mxu0 0
  %503 = vmatprep.subr.bf16.mxu0 0
  %504 = vmatpush2.bf16.msra.mxu0 0
  %505 = vmatprep.subr.bf16.mxu0 0
  %506 = vmatpush2.bf16.msra.mxu0 0
  %507 = vmatprep.subr.bf16.mxu0 0
  %508 = vmatpush2.bf16.msra.mxu0 0
  %509 = vmatprep.subr.bf16.mxu0 0
  %510 = vmatpush2.bf16.msra.mxu0 0
  %511 = vmatprep.subr.bf16.mxu0 0
  %512 = vmatpush2.bf16.msra.mxu0 0
  %513 = vmatprep.subr.bf16.mxu0 %v475
  %514 = vmatpush2.bf16.msra.mxu0 %v472
  %515 = vmatprep.mubr.bf16.mxu0 %v423
  %516 = vmatmul.mubr.bf16.gmra.mxu0 %v197
  %v517 = vpop.f32.mrf.mxu0
  %v518 = vadd.f32 0.0, %v517
  %v519 = vpop.f32.mrf.mxu0
  %v520 = vadd.f32 0.0, %v519
  %v521 = vpop.f32.mrf.mxu0
  %v522 = vadd.f32 0.0, %v521
  %v523 = vpop.f32.mrf.mxu0
  %v524 = vadd.f32 0.0, %v523
  %525 = vmatprep.mubr.bf16.mxu0 %v426
  %526 = vmatmul.mubr.bf16.gmra.mxu0 %v199
  %v527 = vpop.f32.mrf.mxu0
  %v528 = vadd.f32 0.0, %v527
  %v529 = vpop.f32.mrf.mxu0
  %v530 = vadd.f32 0.0, %v529
  %v531 = vpop.f32.mrf.mxu0
  %v532 = vadd.f32 0.0, %v531
  %v533 = vpop.f32.mrf.mxu0
  %v534 = vadd.f32 0.0, %v533
  %535 = vmatprep.mubr.bf16.mxu0 %v429
  %536 = vmatmul.mubr.bf16.gmra.mxu0 %v201
  %v537 = vpop.f32.mrf.mxu0
  %v538 = vadd.f32 0.0, %v537
  %v539 = vpop.f32.mrf.mxu0
  %v540 = vadd.f32 0.0, %v539
  %v541 = vpop.f32.mrf.mxu0
  %v542 = vadd.f32 0.0, %v541
  %v543 = vpop.f32.mrf.mxu0
  %v544 = vadd.f32 0.0, %v543
  %545 = vmatprep.mubr.bf16.mxu0 %v432
  %546 = vmatmul.mubr.bf16.gmra.mxu0 %v203
  %v547 = vpop.f32.mrf.mxu0
  %v548 = vadd.f32 0.0, %v547
  %v549 = vpop.f32.mrf.mxu0
  %v550 = vadd.f32 0.0, %v549
  %v551 = vpop.f32.mrf.mxu0
  %v552 = vadd.f32 0.0, %v551
  %v553 = vpop.f32.mrf.mxu0
  %v554 = vadd.f32 0.0, %v553
  %555 = vmatprep.mubr.bf16.mxu0 %v435
  %556 = vmatmul.mubr.bf16.gmra.mxu0 %v205
  %v557 = vpop.f32.mrf.mxu0
  %v558 = vadd.f32 0.0, %v557
  %v559 = vpop.f32.mrf.mxu0
  %v560 = vadd.f32 0.0, %v559
  %v561 = vpop.f32.mrf.mxu0
  %v562 = vadd.f32 0.0, %v561
  %v563 = vpop.f32.mrf.mxu0
  %v564 = vadd.f32 0.0, %v563
  %565 = vmatprep.mubr.bf16.mxu0 %v438
  %566 = vmatmul.mubr.bf16.gmra.mxu0 %v207
  %v567 = vpop.f32.mrf.mxu0
  %v568 = vadd.f32 0.0, %v567
  %v569 = vpop.f32.mrf.mxu0
  %v570 = vadd.f32 0.0, %v569
  %v571 = vpop.f32.mrf.mxu0
  %v572 = vadd.f32 0.0, %v571
  %v573 = vpop.f32.mrf.mxu0
  %v574 = vadd.f32 0.0, %v573
  %575 = vmatprep.mubr.bf16.mxu0 %v441
  %576 = vmatmul.mubr.bf16.gmra.mxu0 %v209
  %v577 = vpop.f32.mrf.mxu0
  %v578 = vadd.f32 0.0, %v577
  %v579 = vpop.f32.mrf.mxu0
  %v580 = vadd.f32 0.0, %v579
  %v581 = vpop.f32.mrf.mxu0
  %v582 = vadd.f32 0.0, %v581
  %v583 = vpop.f32.mrf.mxu0
  %v584 = vadd.f32 0.0, %v583
  %585 = vmatprep.mubr.bf16.mxu0 %v444
  %586 = vmatmul.mubr.bf16.gmra.mxu0 %v211
  %v587 = vpop.f32.mrf.mxu0
  %v588 = vadd.f32 0.0, %v587
  %v589 = vpop.f32.mrf.mxu0
  %v590 = vadd.f32 0.0, %v589
  %v591 = vpop.f32.mrf.mxu0
  %v592 = vadd.f32 0.0, %v591
  %v593 = vpop.f32.mrf.mxu0
  %v594 = vadd.f32 0.0, %v593
  %595 = vmatprep.mubr.bf16.mxu0 %v447
  %596 = vmatmul.mubr.bf16.gmra.mxu0 %v213
  %v597 = vpop.f32.mrf.mxu0
  %v598 = vadd.f32 0.0, %v597
  %v599 = vpop.f32.mrf.mxu0
  %v600 = vadd.f32 0.0, %v599
  %v601 = vpop.f32.mrf.mxu0
  %v602 = vadd.f32 0.0, %v601
  %v603 = vpop.f32.mrf.mxu0
  %v604 = vadd.f32 0.0, %v603
  %605 = vmatprep.mubr.bf16.mxu0 %v450
  %606 = vmatmul.mubr.bf16.gmra.mxu0 %v215
  %v607 = vpop.f32.mrf.mxu0
  %v608 = vadd.f32 0.0, %v607
  %v609 = vpop.f32.mrf.mxu0
  %v610 = vadd.f32 0.0, %v609
  %v611 = vpop.f32.mrf.mxu0
  %v612 = vadd.f32 0.0, %v611
  %v613 = vpop.f32.mrf.mxu0
  %v614 = vadd.f32 0.0, %v613
  %615 = vmatprep.mubr.bf16.mxu0 %v453
  %616 = vmatmul.mubr.bf16.gmra.mxu0 %v217
  %v617 = vpop.f32.mrf.mxu0
  %v618 = vadd.f32 0.0, %v617
  %v619 = vpop.f32.mrf.mxu0
  %v620 = vadd.f32 0.0, %v619
  %v621 = vpop.f32.mrf.mxu0
  %v622 = vadd.f32 0.0, %v621
  %v623 = vpop.f32.mrf.mxu0
  %v624 = vadd.f32 0.0, %v623
  %625 = vmatprep.mubr.bf16.mxu0 %v456
  %626 = vmatmul.mubr.bf16.gmra.mxu0 %v219
  %v627 = vpop.f32.mrf.mxu0
  %v628 = vadd.f32 0.0, %v627
  %v629 = vpop.f32.mrf.mxu0
  %v630 = vadd.f32 0.0, %v629
  %v631 = vpop.f32.mrf.mxu0
  %v632 = vadd.f32 0.0, %v631
  %v633 = vpop.f32.mrf.mxu0
  %v634 = vadd.f32 0.0, %v633
  %635 = vmatprep.mubr.bf16.mxu0 %v459
  %636 = vmatmul.mubr.bf16.gmra.mxu0 %v221
  %v637 = vpop.f32.mrf.mxu0
  %v638 = vadd.f32 0.0, %v637
  %v639 = vpop.f32.mrf.mxu0
  %v640 = vadd.f32 0.0, %v639
  %v641 = vpop.f32.mrf.mxu0
  %v642 = vadd.f32 0.0, %v641
  %v643 = vpop.f32.mrf.mxu0
  %v644 = vadd.f32 0.0, %v643
  %645 = vmatprep.mubr.bf16.mxu0 %v462
  %646 = vmatmul.mubr.bf16.gmra.mxu0 %v223
  %v647 = vpop.f32.mrf.mxu0
  %v648 = vadd.f32 0.0, %v647
  %v649 = vpop.f32.mrf.mxu0
  %v650 = vadd.f32 0.0, %v649
  %v651 = vpop.f32.mrf.mxu0
  %v652 = vadd.f32 0.0, %v651
  %v653 = vpop.f32.mrf.mxu0
  %v654 = vadd.f32 0.0, %v653
  %655 = vmatprep.mubr.bf16.mxu0 %v465
  %656 = vmatmul.mubr.bf16.gmra.mxu0 %v225
  %v657 = vpop.f32.mrf.mxu0
  %v658 = vadd.f32 0.0, %v657
  %v659 = vpop.f32.mrf.mxu0
  %v660 = vadd.f32 0.0, %v659
  %v661 = vpop.f32.mrf.mxu0
  %v662 = vadd.f32 0.0, %v661
  %v663 = vpop.f32.mrf.mxu0
  %v664 = vadd.f32 0.0, %v663
  %665 = vmatprep.mubr.bf16.mxu0 %v468
  %666 = vmatmul.mubr.bf16.gmra.mxu0 %v227
  %v667 = vpop.f32.mrf.mxu0
  %v668 = vadd.f32 0.0, %v667
  %v669 = vpop.f32.mrf.mxu0
  %v670 = vadd.f32 0.0, %v669
  %v671 = vpop.f32.mrf.mxu0
  %v672 = vadd.f32 0.0, %v671
  %v673 = vpop.f32.mrf.mxu0
  %v674 = vadd.f32 0.0, %v673
  %675 = vdwg.mxu0
  %676 = vmatprep.subr.bf16.mxu0 %v384
  %677 = vmatpush1.bf16.msra.mxu0 %v383
  %678 = vmatprep.subr.bf16.mxu0 %v380
  %679 = vmatpush1.bf16.msra.mxu0 %v379
  %680 = vmatprep.subr.bf16.mxu0 %v376
  %681 = vmatpush1.bf16.msra.mxu0 %v375
  %682 = vmatprep.subr.bf16.mxu0 %v372
  %683 = vmatpush1.bf16.msra.mxu0 %v371
  %684 = vmatprep.subr.bf16.mxu0 %v368
  %685 = vmatpush1.bf16.msra.mxu0 %v367
  %686 = vmatprep.subr.bf16.mxu0 %v364
  %687 = vmatpush1.bf16.msra.mxu0 %v363
  %688 = vmatprep.subr.bf16.mxu0 %v360
  %689 = vmatpush1.bf16.msra.mxu0 %v359
  %690 = vmatprep.subr.bf16.mxu0 %v356
  %691 = vmatpush1.bf16.msra.mxu0 %v355
  %692 = vmatprep.subr.bf16.mxu0 0
  %693 = vmatpush2.bf16.msra.mxu0 0
  %694 = vmatprep.subr.bf16.mxu0 0
  %695 = vmatpush2.bf16.msra.mxu0 0
  %696 = vmatprep.subr.bf16.mxu0 0
  %697 = vmatpush2.bf16.msra.mxu0 0
  %698 = vmatprep.subr.bf16.mxu0 0
  %699 = vmatpush2.bf16.msra.mxu0 0
  %700 = vmatprep.subr.bf16.mxu0 0
  %701 = vmatpush2.bf16.msra.mxu0 0
  %702 = vmatprep.subr.bf16.mxu0 0
  %703 = vmatpush2.bf16.msra.mxu0 0
  %704 = vmatprep.subr.bf16.mxu0 0
  %705 = vmatpush2.bf16.msra.mxu0 0
  %706 = vmatprep.subr.bf16.mxu0 %v481
  %707 = vmatpush2.bf16.msra.mxu0 %v478
  %708 = vmatprep.mubr.bf16.mxu0 %v423
  %709 = vmatmul.mubr.bf16.gmra.mxu0 %v197
  %v710 = vpop.f32.mrf.mxu0
  %v711 = vadd.f32 0.0, %v710
  %v712 = vpop.f32.mrf.mxu0
  %v713 = vadd.f32 0.0, %v712
  %v714 = vpop.f32.mrf.mxu0
  %v715 = vadd.f32 0.0, %v714
  %v716 = vpop.f32.mrf.mxu0
  %v717 = vadd.f32 0.0, %v716
  %718 = vmatprep.mubr.bf16.mxu0 %v426
  %719 = vmatmul.mubr.bf16.gmra.mxu0 %v199
  %v720 = vpop.f32.mrf.mxu0
  %v721 = vadd.f32 0.0, %v720
  %v722 = vpop.f32.mrf.mxu0
  %v723 = vadd.f32 0.0, %v722
  %v724 = vpop.f32.mrf.mxu0
  %v725 = vadd.f32 0.0, %v724
  %v726 = vpop.f32.mrf.mxu0
  %v727 = vadd.f32 0.0, %v726
  %728 = vmatprep.mubr.bf16.mxu0 %v429
  %729 = vmatmul.mubr.bf16.gmra.mxu0 %v201
  %v730 = vpop.f32.mrf.mxu0
  %v731 = vadd.f32 0.0, %v730
  %v732 = vpop.f32.mrf.mxu0
  %v733 = vadd.f32 0.0, %v732
  %v734 = vpop.f32.mrf.mxu0
  %v735 = vadd.f32 0.0, %v734
  %v736 = vpop.f32.mrf.mxu0
  %v737 = vadd.f32 0.0, %v736
  %738 = vmatprep.mubr.bf16.mxu0 %v432
  %739 = vmatmul.mubr.bf16.gmra.mxu0 %v203
  %v740 = vpop.f32.mrf.mxu0
  %v741 = vadd.f32 0.0, %v740
  %v742 = vpop.f32.mrf.mxu0
  %v743 = vadd.f32 0.0, %v742
  %v744 = vpop.f32.mrf.mxu0
  %v745 = vadd.f32 0.0, %v744
  %v746 = vpop.f32.mrf.mxu0
  %v747 = vadd.f32 0.0, %v746
  %748 = vmatprep.mubr.bf16.mxu0 %v435
  %749 = vmatmul.mubr.bf16.gmra.mxu0 %v205
  %v750 = vpop.f32.mrf.mxu0
  %v751 = vadd.f32 0.0, %v750
  %v752 = vpop.f32.mrf.mxu0
  %v753 = vadd.f32 0.0, %v752
  %v754 = vpop.f32.mrf.mxu0
  %v755 = vadd.f32 0.0, %v754
  %v756 = vpop.f32.mrf.mxu0
  %v757 = vadd.f32 0.0, %v756
  %758 = vmatprep.mubr.bf16.mxu0 %v438
  %759 = vmatmul.mubr.bf16.gmra.mxu0 %v207
  %v760 = vpop.f32.mrf.mxu0
  %v761 = vadd.f32 0.0, %v760
  %v762 = vpop.f32.mrf.mxu0
  %v763 = vadd.f32 0.0, %v762
  %v764 = vpop.f32.mrf.mxu0
  %v765 = vadd.f32 0.0, %v764
  %v766 = vpop.f32.mrf.mxu0
  %v767 = vadd.f32 0.0, %v766
  %768 = vmatprep.mubr.bf16.mxu0 %v441
  %769 = vmatmul.mubr.bf16.gmra.mxu0 %v209
  %v770 = vpop.f32.mrf.mxu0
  %v771 = vadd.f32 0.0, %v770
  %v772 = vpop.f32.mrf.mxu0
  %v773 = vadd.f32 0.0, %v772
  %v774 = vpop.f32.mrf.mxu0
  %v775 = vadd.f32 0.0, %v774
  %v776 = vpop.f32.mrf.mxu0
  %v777 = vadd.f32 0.0, %v776
  %778 = vmatprep.mubr.bf16.mxu0 %v444
  %779 = vmatmul.mubr.bf16.gmra.mxu0 %v211
  %v780 = vpop.f32.mrf.mxu0
  %v781 = vadd.f32 0.0, %v780
  %v782 = vpop.f32.mrf.mxu0
  %v783 = vadd.f32 0.0, %v782
  %v784 = vpop.f32.mrf.mxu0
  %v785 = vadd.f32 0.0, %v784
  %v786 = vpop.f32.mrf.mxu0
  %v787 = vadd.f32 0.0, %v786
  %788 = vmatprep.mubr.bf16.mxu0 %v447
  %789 = vmatmul.mubr.bf16.gmra.mxu0 %v213
  %v790 = vpop.f32.mrf.mxu0
  %v791 = vadd.f32 0.0, %v790
  %v792 = vpop.f32.mrf.mxu0
  %v793 = vadd.f32 0.0, %v792
  %v794 = vpop.f32.mrf.mxu0
  %v795 = vadd.f32 0.0, %v794
  %v796 = vpop.f32.mrf.mxu0
  %v797 = vadd.f32 0.0, %v796
  %798 = vmatprep.mubr.bf16.mxu0 %v450
  %799 = vmatmul.mubr.bf16.gmra.mxu0 %v215
  %v800 = vpop.f32.mrf.mxu0
  %v801 = vadd.f32 0.0, %v800
  %v802 = vpop.f32.mrf.mxu0
  %v803 = vadd.f32 0.0, %v802
  %v804 = vpop.f32.mrf.mxu0
  %v805 = vadd.f32 0.0, %v804
  %v806 = vpop.f32.mrf.mxu0
  %v807 = vadd.f32 0.0, %v806
  %808 = vmatprep.mubr.bf16.mxu0 %v453
  %809 = vmatmul.mubr.bf16.gmra.mxu0 %v217
  %v810 = vpop.f32.mrf.mxu0
  %v811 = vadd.f32 0.0, %v810
  %v812 = vpop.f32.mrf.mxu0
  %v813 = vadd.f32 0.0, %v812
  %v814 = vpop.f32.mrf.mxu0
  %v815 = vadd.f32 0.0, %v814
  %v816 = vpop.f32.mrf.mxu0
  %v817 = vadd.f32 0.0, %v816
  %818 = vmatprep.mubr.bf16.mxu0 %v456
  %819 = vmatmul.mubr.bf16.gmra.mxu0 %v219
  %v820 = vpop.f32.mrf.mxu0
  %v821 = vadd.f32 0.0, %v820
  %v822 = vpop.f32.mrf.mxu0
  %v823 = vadd.f32 0.0, %v822
  %v824 = vpop.f32.mrf.mxu0
  %v825 = vadd.f32 0.0, %v824
  %v826 = vpop.f32.mrf.mxu0
  %v827 = vadd.f32 0.0, %v826
  %828 = vmatprep.mubr.bf16.mxu0 %v459
  %829 = vmatmul.mubr.bf16.gmra.mxu0 %v221
  %v830 = vpop.f32.mrf.mxu0
  %v831 = vadd.f32 0.0, %v830
  %v832 = vpop.f32.mrf.mxu0
  %v833 = vadd.f32 0.0, %v832
  %v834 = vpop.f32.mrf.mxu0
  %v835 = vadd.f32 0.0, %v834
  %v836 = vpop.f32.mrf.mxu0
  %v837 = vadd.f32 0.0, %v836
  %838 = vmatprep.mubr.bf16.mxu0 %v462
  %839 = vmatmul.mubr.bf16.gmra.mxu0 %v223
  %v840 = vpop.f32.mrf.mxu0
  %v841 = vadd.f32 0.0, %v840
  %v842 = vpop.f32.mrf.mxu0
  %v843 = vadd.f32 0.0, %v842
  %v844 = vpop.f32.mrf.mxu0
  %v845 = vadd.f32 0.0, %v844
  %v846 = vpop.f32.mrf.mxu0
  %v847 = vadd.f32 0.0, %v846
  %848 = vmatprep.mubr.bf16.mxu0 %v465
  %849 = vmatmul.mubr.bf16.gmra.mxu0 %v225
  %v850 = vpop.f32.mrf.mxu0
  %v851 = vadd.f32 0.0, %v850
  %v852 = vpop.f32.mrf.mxu0
  %v853 = vadd.f32 0.0, %v852
  %v854 = vpop.f32.mrf.mxu0
  %v855 = vadd.f32 0.0, %v854
  %v856 = vpop.f32.mrf.mxu0
  %v857 = vadd.f32 0.0, %v856
  %858 = vmatprep.mubr.bf16.mxu0 %v468
  %859 = vmatmul.mubr.bf16.gmra.mxu0 %v227
  %v860 = vpop.f32.mrf.mxu0
  %v861 = vadd.f32 0.0, %v860
  %v862 = vpop.f32.mrf.mxu0
  %v863 = vadd.f32 0.0, %v862
  %v864 = vpop.f32.mrf.mxu0
  %v865 = vadd.f32 0.0, %v864
  %v866 = vpop.f32.mrf.mxu0
  %v867 = vadd.f32 0.0, %v866
  %868 = vdwg.mxu0
  %v869 = vmax.f32 %v518, %v598
  %v870 = vmax.f32 %v520, %v600
  %v871 = vmax.f32 %v711, %v791
  %v872 = vmax.f32 %v713, %v793
  %v873 = vmax.f32 %v522, %v602
  %v874 = vmax.f32 %v524, %v604
  %v875 = vmax.f32 %v715, %v795
  %v876 = vmax.f32 %v717, %v797
  %v877 = vmax.f32 %v528, %v608
  %v878 = vmax.f32 %v530, %v610
  %v879 = vmax.f32 %v721, %v801
  %v880 = vmax.f32 %v723, %v803
  %v881 = vmax.f32 %v532, %v612
  %v882 = vmax.f32 %v534, %v614
  %v883 = vmax.f32 %v725, %v805
  %v884 = vmax.f32 %v727, %v807
  %v885 = vmax.f32 %v538, %v618
  %v886 = vmax.f32 %v540, %v620
  %v887 = vmax.f32 %v731, %v811
  %v888 = vmax.f32 %v733, %v813
  %v889 = vmax.f32 %v542, %v622
  %v890 = vmax.f32 %v544, %v624
  %v891 = vmax.f32 %v735, %v815
  %v892 = vmax.f32 %v737, %v817
  %v893 = vmax.f32 %v548, %v628
  %v894 = vmax.f32 %v550, %v630
  %v895 = vmax.f32 %v741, %v821
  %v896 = vmax.f32 %v743, %v823
  %v897 = vmax.f32 %v552, %v632
  %v898 = vmax.f32 %v554, %v634
  %v899 = vmax.f32 %v745, %v825
  %v900 = vmax.f32 %v747, %v827
  %v901 = vmax.f32 %v558, %v638
  %v902 = vmax.f32 %v560, %v640
  %v903 = vmax.f32 %v751, %v831
  %v904 = vmax.f32 %v753, %v833
  %v905 = vmax.f32 %v562, %v642
  %v906 = vmax.f32 %v564, %v644
  %v907 = vmax.f32 %v755, %v835
  %v908 = vmax.f32 %v757, %v837
  %v909 = vmax.f32 %v568, %v648
  %v910 = vmax.f32 %v570, %v650
  %v911 = vmax.f32 %v761, %v841
  %v912 = vmax.f32 %v763, %v843
  %v913 = vmax.f32 %v572, %v652
  %v914 = vmax.f32 %v574, %v654
  %v915 = vmax.f32 %v765, %v845
  %v916 = vmax.f32 %v767, %v847
  %v917 = vmax.f32 %v578, %v658
  %v918 = vmax.f32 %v580, %v660
  %v919 = vmax.f32 %v771, %v851
  %v920 = vmax.f32 %v773, %v853
  %v921 = vmax.f32 %v582, %v662
  %v922 = vmax.f32 %v584, %v664
  %v923 = vmax.f32 %v775, %v855
  %v924 = vmax.f32 %v777, %v857
  %v925 = vmax.f32 %v588, %v668
  %v926 = vmax.f32 %v590, %v670
  %v927 = vmax.f32 %v781, %v861
  %v928 = vmax.f32 %v783, %v863
  %v929 = vmax.f32 %v592, %v672
  %v930 = vmax.f32 %v594, %v674
  %v931 = vmax.f32 %v785, %v865
  %v932 = vmax.f32 %v787, %v867
  %v933 = vmax.f32 %v869, %v871
  %v934 = vmax.f32 %v870, %v872
  %v935 = vmax.f32 %v873, %v875
  %v936 = vmax.f32 %v874, %v876
  %v937 = vmax.f32 %v877, %v879
  %v938 = vmax.f32 %v878, %v880
  %v939 = vmax.f32 %v881, %v883
  %v940 = vmax.f32 %v882, %v884
  %v941 = vmax.f32 %v885, %v887
  %v942 = vmax.f32 %v886, %v888
  %v943 = vmax.f32 %v889, %v891
  %v944 = vmax.f32 %v890, %v892
  %v945 = vmax.f32 %v893, %v895
  %v946 = vmax.f32 %v894, %v896
  %v947 = vmax.f32 %v897, %v899
  %v948 = vmax.f32 %v898, %v900
  %v949 = vmax.f32 %v901, %v903
  %v950 = vmax.f32 %v902, %v904
  %v951 = vmax.f32 %v905, %v907
  %v952 = vmax.f32 %v906, %v908
  %v953 = vmax.f32 %v909, %v911
  %v954 = vmax.f32 %v910, %v912
  %v955 = vmax.f32 %v913, %v915
  %v956 = vmax.f32 %v914, %v916
  %v957 = vmax.f32 %v917, %v919
  %v958 = vmax.f32 %v918, %v920
  %v959 = vmax.f32 %v921, %v923
  %v960 = vmax.f32 %v922, %v924
  %v961 = vmax.f32 %v925, %v927
  %v962 = vmax.f32 %v926, %v928
  %v963 = vmax.f32 %v929, %v931
  %v964 = vmax.f32 %v930, %v932
  %v965 = vld [vmem:[%s2] sm:$0x3]
  %v967 = vlaneseq
  %v968 = vshrl.u32 %v967, 7
  %v969 = vsub.s32 0, %v968
  %v970 = vrot.slane %v965, %v969
  %v971 = vlaneseq
  %v972 = vshrl.u32 %v971, 7
  %v973 = vsub.s32 1, %v972
  %v974 = vrot.slane %v965, %v973
  %v977 = vadd.f32 %v933, %v970
  %v978 = vadd.f32 %v934, %v974
  %v979 = vadd.f32 %v935, %v970
  %v980 = vadd.f32 %v936, %v974
  %v981 = vadd.f32 %v937, %v970
  %v982 = vadd.f32 %v938, %v974
  %v983 = vadd.f32 %v939, %v970
  %v984 = vadd.f32 %v940, %v974
  %v985 = vadd.f32 %v941, %v970
  %v986 = vadd.f32 %v942, %v974
  %v987 = vadd.f32 %v943, %v970
  %v988 = vadd.f32 %v944, %v974
  %v989 = vadd.f32 %v945, %v970
  %v990 = vadd.f32 %v946, %v974
  %v991 = vadd.f32 %v947, %v970
  %v992 = vadd.f32 %v948, %v974
  %v993 = vadd.f32 %v949, %v970
  %v994 = vadd.f32 %v950, %v974
  %v995 = vadd.f32 %v951, %v970
  %v996 = vadd.f32 %v952, %v974
  %v997 = vadd.f32 %v953, %v970
  %v998 = vadd.f32 %v954, %v974
  %v999 = vadd.f32 %v955, %v970
  %v1000 = vadd.f32 %v956, %v974
  %v1001 = vadd.f32 %v957, %v970
  %v1002 = vadd.f32 %v958, %v974
  %v1003 = vadd.f32 %v959, %v970
  %v1004 = vadd.f32 %v960, %v974
  %v1005 = vadd.f32 %v961, %v970
  %v1006 = vadd.f32 %v962, %v974
  %v1007 = vadd.f32 %v963, %v970
  %v1008 = vadd.f32 %v964, %v974
  %v1009 = vmax.f32 %v977, 0.0
  %v1010 = vmax.f32 %v978, 0.0
  %v1011 = vmax.f32 %v979, 0.0
  %v1012 = vmax.f32 %v980, 0.0
  %v1013 = vmax.f32 %v981, 0.0
  %v1014 = vmax.f32 %v982, 0.0
  %v1015 = vmax.f32 %v983, 0.0
  %v1016 = vmax.f32 %v984, 0.0
  %v1017 = vmax.f32 %v985, 0.0
  %v1018 = vmax.f32 %v986, 0.0
  %v1019 = vmax.f32 %v987, 0.0
  %v1020 = vmax.f32 %v988, 0.0
  %v1021 = vmax.f32 %v989, 0.0
  %v1022 = vmax.f32 %v990, 0.0
  %v1023 = vmax.f32 %v991, 0.0
  %v1024 = vmax.f32 %v992, 0.0
  %v1025 = vmax.f32 %v993, 0.0
  %v1026 = vmax.f32 %v994, 0.0
  %v1027 = vmax.f32 %v995, 0.0
  %v1028 = vmax.f32 %v996, 0.0
  %v1029 = vmax.f32 %v997, 0.0
  %v1030 = vmax.f32 %v998, 0.0
  %v1031 = vmax.f32 %v999, 0.0
  %v1032 = vmax.f32 %v1000, 0.0
  %v1033 = vmax.f32 %v1001, 0.0
  %v1034 = vmax.f32 %v1002, 0.0
  %v1035 = vmax.f32 %v1003, 0.0
  %v1036 = vmax.f32 %v1004, 0.0
  %v1037 = vmax.f32 %v1005, 0.0
  %v1038 = vmax.f32 %v1006, 0.0
  %v1039 = vmax.f32 %v1007, 0.0
  %v1040 = vmax.f32 %v1008, 0.0
  %v1041 = vpack.c.bf16 %v1009, %v1009
  %v1042 = vpack.c.bf16 %v1010, %v1010
  %v1043 = vpack.c.bf16 %v1011, %v1011
  %v1044 = vpack.c.bf16 %v1012, %v1012
  %v1045 = vpack.c.bf16 %v1013, %v1013
  %v1046 = vpack.c.bf16 %v1014, %v1014
  %v1047 = vpack.c.bf16 %v1015, %v1015
  %v1048 = vpack.c.bf16 %v1016, %v1016
  %v1049 = vpack.c.bf16 %v1017, %v1017
  %v1050 = vpack.c.bf16 %v1018, %v1018
  %v1051 = vpack.c.bf16 %v1019, %v1019
  %v1052 = vpack.c.bf16 %v1020, %v1020
  %v1053 = vpack.c.bf16 %v1021, %v1021
  %v1054 = vpack.c.bf16 %v1022, %v1022
  %v1055 = vpack.c.bf16 %v1023, %v1023
  %v1056 = vpack.c.bf16 %v1024, %v1024
  %v1057 = vpack.c.bf16 %v1025, %v1025
  %v1058 = vpack.c.bf16 %v1026, %v1026
  %v1059 = vpack.c.bf16 %v1027, %v1027
  %v1060 = vpack.c.bf16 %v1028, %v1028
  %v1061 = vpack.c.bf16 %v1029, %v1029
  %v1062 = vpack.c.bf16 %v1030, %v1030
  %v1063 = vpack.c.bf16 %v1031, %v1031
  %v1064 = vpack.c.bf16 %v1032, %v1032
  %v1065 = vpack.c.bf16 %v1033, %v1033
  %v1066 = vpack.c.bf16 %v1034, %v1034
  %v1067 = vpack.c.bf16 %v1035, %v1035
  %v1068 = vpack.c.bf16 %v1036, %v1036
  %v1069 = vpack.c.bf16 %v1037, %v1037
  %v1070 = vpack.c.bf16 %v1038, %v1038
  %v1071 = vpack.c.bf16 %v1039, %v1039
  %v1072 = vpack.c.bf16 %v1040, %v1040
  %v1105 = vunpack.c.l.b16 %v1041
  %v1106 = vunpack.c.l.b16 %v1042
  %v1107 = vunpack.c.l.b16 %v1043
  %v1108 = vunpack.c.l.b16 %v1044
  %v1109 = vunpack.c.l.b16 %v1045
  %v1110 = vunpack.c.l.b16 %v1046
  %v1111 = vunpack.c.l.b16 %v1047
  %v1112 = vunpack.c.l.b16 %v1048
  %v1113 = vunpack.c.l.b16 %v1049
  %v1114 = vunpack.c.l.b16 %v1050
  %v1115 = vunpack.c.l.b16 %v1051
  %v1116 = vunpack.c.l.b16 %v1052
  %v1117 = vunpack.c.l.b16 %v1053
  %v1118 = vunpack.c.l.b16 %v1054
  %v1119 = vunpack.c.l.b16 %v1055
  %v1120 = vunpack.c.l.b16 %v1056
  %v1121 = vunpack.c.l.b16 %v1057
  %v1122 = vunpack.c.l.b16 %v1058
  %v1123 = vunpack.c.l.b16 %v1059
  %v1124 = vunpack.c.l.b16 %v1060
  %v1125 = vunpack.c.l.b16 %v1061
  %v1126 = vunpack.c.l.b16 %v1062
  %v1127 = vunpack.c.l.b16 %v1063
  %v1128 = vunpack.c.l.b16 %v1064
  %v1129 = vunpack.c.l.b16 %v1065
  %v1130 = vunpack.c.l.b16 %v1066
  %v1131 = vunpack.c.l.b16 %v1067
  %v1132 = vunpack.c.l.b16 %v1068
  %v1133 = vunpack.c.l.b16 %v1069
  %v1134 = vunpack.c.l.b16 %v1070
  %v1135 = vunpack.c.l.b16 %v1071
  %v1136 = vunpack.c.l.b16 %v1072
  %v1137 = vld [vmem:[%s3] sm:$0xff]
  %v1138 = vld [vmem:[%s3 + $0x8] sm:$0xff]
  %v1139 = vld [vmem:[%s3 + $0x10] sm:$0xff]
  %v1140 = vld [vmem:[%s3 + $0x18] sm:$0xff]
  %v1141 = vld [vmem:[%s3 + $0x20] sm:$0xff]
  %v1142 = vld [vmem:[%s3 + $0x28] sm:$0xff]
  %v1143 = vld [vmem:[%s3 + $0x30] sm:$0xff]
  %v1144 = vld [vmem:[%s3 + $0x38] sm:$0xff]
  %v1145 = vld [vmem:[%s3 + $0x40] sm:$0xff]
  %v1146 = vld [vmem:[%s3 + $0x48] sm:$0xff]
  %v1147 = vld [vmem:[%s3 + $0x50] sm:$0xff]
  %v1148 = vld [vmem:[%s3 + $0x58] sm:$0xff]
  %v1149 = vld [vmem:[%s3 + $0x60] sm:$0xff]
  %v1150 = vld [vmem:[%s3 + $0x68] sm:$0xff]
  %v1151 = vld [vmem:[%s3 + $0x70] sm:$0xff]
  %v1152 = vld [vmem:[%s3 + $0x78] sm:$0xff]
  %v1153 = vld [vmem:[%s3 + $0x80] sm:$0xff]
  %v1154 = vld [vmem:[%s3 + $0x88] sm:$0xff]
  %v1155 = vld [vmem:[%s3 + $0x90] sm:$0xff]
  %v1156 = vld [vmem:[%s3 + $0x98] sm:$0xff]
  %v1157 = vld [vmem:[%s3 + $0xa0] sm:$0xff]
  %v1158 = vld [vmem:[%s3 + $0xa8] sm:$0xff]
  %v1159 = vld [vmem:[%s3 + $0xb0] sm:$0xff]
  %v1160 = vld [vmem:[%s3 + $0xb8] sm:$0xff]
  %v1161 = vld [vmem:[%s3 + $0xc0] sm:$0xff]
  %v1162 = vld [vmem:[%s3 + $0xc8] sm:$0xff]
  %v1163 = vld [vmem:[%s3 + $0xd0] sm:$0xff]
  %v1164 = vld [vmem:[%s3 + $0xd8] sm:$0xff]
  %v1165 = vld [vmem:[%s3 + $0xe0] sm:$0xff]
  %v1166 = vld [vmem:[%s3 + $0xe8] sm:$0xff]
  %v1167 = vld [vmem:[%s3 + $0xf0] sm:$0xff]
  %v1168 = vld [vmem:[%s3 + $0xf8] sm:$0xff]
  %v1169 = vld [vmem:[%s3 + $0x100] sm:$0xff]
  %v1170 = vld [vmem:[%s3 + $0x108] sm:$0xff]
  %v1171 = vld [vmem:[%s3 + $0x110] sm:$0xff]
  %v1172 = vld [vmem:[%s3 + $0x118] sm:$0xff]
  %v1173 = vld [vmem:[%s3 + $0x120] sm:$0xff]
  %v1174 = vld [vmem:[%s3 + $0x128] sm:$0xff]
  %v1175 = vld [vmem:[%s3 + $0x130] sm:$0xff]
  %v1176 = vld [vmem:[%s3 + $0x138] sm:$0xff]
  %v1177 = vld [vmem:[%s3 + $0x140] sm:$0xff]
  %v1178 = vld [vmem:[%s3 + $0x148] sm:$0xff]
  %v1179 = vld [vmem:[%s3 + $0x150] sm:$0xff]
  %v1180 = vld [vmem:[%s3 + $0x158] sm:$0xff]
  %v1181 = vld [vmem:[%s3 + $0x160] sm:$0xff]
  %v1182 = vld [vmem:[%s3 + $0x168] sm:$0xff]
  %v1183 = vld [vmem:[%s3 + $0x170] sm:$0xff]
  %v1184 = vld [vmem:[%s3 + $0x178] sm:$0xff]
  %v1185 = vld [vmem:[%s3 + $0x180] sm:$0xff]
  %v1186 = vld [vmem:[%s3 + $0x188] sm:$0xff]
  %v1187 = vld [vmem:[%s3 + $0x190] sm:$0xff]
  %v1188 = vld [vmem:[%s3 + $0x198] sm:$0xff]
  %v1189 = vld [vmem:[%s3 + $0x1a0] sm:$0xff]
  %v1190 = vld [vmem:[%s3 + $0x1a8] sm:$0xff]
  %v1191 = vld [vmem:[%s3 + $0x1b0] sm:$0xff]
  %v1192 = vld [vmem:[%s3 + $0x1b8] sm:$0xff]
  %v1193 = vld [vmem:[%s3 + $0x1c0] sm:$0xff]
  %v1194 = vld [vmem:[%s3 + $0x1c8] sm:$0xff]
  %v1195 = vld [vmem:[%s3 + $0x1d0] sm:$0xff]
  %v1196 = vld [vmem:[%s3 + $0x1d8] sm:$0xff]
  %v1197 = vld [vmem:[%s3 + $0x1e0] sm:$0xff]
  %v1198 = vld [vmem:[%s3 + $0x1e8] sm:$0xff]
  %v1199 = vld [vmem:[%s3 + $0x1f0] sm:$0xff]
  %v1200 = vld [vmem:[%s3 + $0x1f8] sm:$0xff]
  %v1201 = vld [vmem:[%s3 + $0x200] sm:$0xff]
  %v1202 = vld [vmem:[%s3 + $0x208] sm:$0xff]
  %v1203 = vld [vmem:[%s3 + $0x210] sm:$0xff]
  %v1204 = vld [vmem:[%s3 + $0x218] sm:$0xff]
  %v1205 = vld [vmem:[%s3 + $0x220] sm:$0xff]
  %v1206 = vld [vmem:[%s3 + $0x228] sm:$0xff]
  %v1207 = vld [vmem:[%s3 + $0x230] sm:$0xff]
  %v1208 = vld [vmem:[%s3 + $0x238] sm:$0xff]
  %v1209 = vld [vmem:[%s3 + $0x240] sm:$0xff]
  %v1210 = vld [vmem:[%s3 + $0x248] sm:$0xff]
  %v1211 = vld [vmem:[%s3 + $0x250] sm:$0xff]
  %v1212 = vld [vmem:[%s3 + $0x258] sm:$0xff]
  %v1213 = vld [vmem:[%s3 + $0x260] sm:$0xff]
  %v1214 = vld [vmem:[%s3 + $0x268] sm:$0xff]
  %v1215 = vld [vmem:[%s3 + $0x270] sm:$0xff]
  %v1216 = vld [vmem:[%s3 + $0x278] sm:$0xff]
  %v1217 = vld [vmem:[%s3 + $0x280] sm:$0xff]
  %v1218 = vld [vmem:[%s3 + $0x288] sm:$0xff]
  %v1219 = vld [vmem:[%s3 + $0x290] sm:$0xff]
  %v1220 = vld [vmem:[%s3 + $0x298] sm:$0xff]
  %v1221 = vld [vmem:[%s3 + $0x2a0] sm:$0xff]
  %v1222 = vld [vmem:[%s3 + $0x2a8] sm:$0xff]
  %v1223 = vld [vmem:[%s3 + $0x2b0] sm:$0xff]
  %v1224 = vld [vmem:[%s3 + $0x2b8] sm:$0xff]
  %v1225 = vld [vmem:[%s3 + $0x2c0] sm:$0xff]
  %v1226 = vld [vmem:[%s3 + $0x2c8] sm:$0xff]
  %v1227 = vld [vmem:[%s3 + $0x2d0] sm:$0xff]
  %v1228 = vld [vmem:[%s3 + $0x2d8] sm:$0xff]
  %v1229 = vld [vmem:[%s3 + $0x2e0] sm:$0xff]
  %v1230 = vld [vmem:[%s3 + $0x2e8] sm:$0xff]
  %v1231 = vld [vmem:[%s3 + $0x2f0] sm:$0xff]
  %v1232 = vld [vmem:[%s3 + $0x2f8] sm:$0xff]
  %v1233 = vld [vmem:[%s3 + $0x300] sm:$0xff]
  %v1234 = vld [vmem:[%s3 + $0x308] sm:$0xff]
  %v1235 = vld [vmem:[%s3 + $0x310] sm:$0xff]
  %v1236 = vld [vmem:[%s3 + $0x318] sm:$0xff]
  %v1237 = vld [vmem:[%s3 + $0x320] sm:$0xff]
  %v1238 = vld [vmem:[%s3 + $0x328] sm:$0xff]
  %v1239 = vld [vmem:[%s3 + $0x330] sm:$0xff]
  %v1240 = vld [vmem:[%s3 + $0x338] sm:$0xff]
  %v1241 = vld [vmem:[%s3 + $0x340] sm:$0xff]
  %v1242 = vld [vmem:[%s3 + $0x348] sm:$0xff]
  %v1243 = vld [vmem:[%s3 + $0x350] sm:$0xff]
  %v1244 = vld [vmem:[%s3 + $0x358] sm:$0xff]
  %v1245 = vld [vmem:[%s3 + $0x360] sm:$0xff]
  %v1246 = vld [vmem:[%s3 + $0x368] sm:$0xff]
  %v1247 = vld [vmem:[%s3 + $0x370] sm:$0xff]
  %v1248 = vld [vmem:[%s3 + $0x378] sm:$0xff]
  %v1249 = vld [vmem:[%s3 + $0x380] sm:$0xff]
  %v1250 = vld [vmem:[%s3 + $0x388] sm:$0xff]
  %v1251 = vld [vmem:[%s3 + $0x390] sm:$0xff]
  %v1252 = vld [vmem:[%s3 + $0x398] sm:$0xff]
  %v1253 = vld [vmem:[%s3 + $0x3a0] sm:$0xff]
  %v1254 = vld [vmem:[%s3 + $0x3a8] sm:$0xff]
  %v1255 = vld [vmem:[%s3 + $0x3b0] sm:$0xff]
  %v1256 = vld [vmem:[%s3 + $0x3b8] sm:$0xff]
  %v1257 = vld [vmem:[%s3 + $0x3c0] sm:$0xff]
  %v1258 = vld [vmem:[%s3 + $0x3c8] sm:$0xff]
  %v1259 = vld [vmem:[%s3 + $0x3d0] sm:$0xff]
  %v1260 = vld [vmem:[%s3 + $0x3d8] sm:$0xff]
  %v1261 = vld [vmem:[%s3 + $0x3e0] sm:$0xff]
  %v1262 = vld [vmem:[%s3 + $0x3e8] sm:$0xff]
  %v1263 = vld [vmem:[%s3 + $0x3f0] sm:$0xff]
  %v1264 = vld [vmem:[%s3 + $0x3f8] sm:$0xff]
  %v1265 = vld [vmem:[%s3 + $0x400] sm:$0xff]
  %v1266 = vld [vmem:[%s3 + $0x408] sm:$0xff]
  %v1267 = vld [vmem:[%s3 + $0x410] sm:$0xff]
  %v1268 = vld [vmem:[%s3 + $0x418] sm:$0xff]
  %v1269 = vld [vmem:[%s3 + $0x420] sm:$0xff]
  %v1270 = vld [vmem:[%s3 + $0x428] sm:$0xff]
  %v1271 = vld [vmem:[%s3 + $0x430] sm:$0xff]
  %v1272 = vld [vmem:[%s3 + $0x438] sm:$0xff]
  %v1273 = vld [vmem:[%s3 + $0x440] sm:$0xff]
  %v1274 = vld [vmem:[%s3 + $0x448] sm:$0xff]
  %v1275 = vld [vmem:[%s3 + $0x450] sm:$0xff]
  %v1276 = vld [vmem:[%s3 + $0x458] sm:$0xff]
  %v1277 = vld [vmem:[%s3 + $0x460] sm:$0xff]
  %v1278 = vld [vmem:[%s3 + $0x468] sm:$0xff]
  %v1279 = vld [vmem:[%s3 + $0x470] sm:$0xff]
  %v1280 = vld [vmem:[%s3 + $0x478] sm:$0xff]
  %v1281 = vld [vmem:[%s3 + $0x480] sm:$0xff]
  %v1282 = vld [vmem:[%s3 + $0x488] sm:$0xff]
  %v1283 = vld [vmem:[%s3 + $0x490] sm:$0xff]
  %v1284 = vld [vmem:[%s3 + $0x498] sm:$0xff]
  %v1285 = vld [vmem:[%s3 + $0x4a0] sm:$0xff]
  %v1286 = vld [vmem:[%s3 + $0x4a8] sm:$0xff]
  %v1287 = vld [vmem:[%s3 + $0x4b0] sm:$0xff]
  %v1288 = vld [vmem:[%s3 + $0x4b8] sm:$0xff]
  %v1289 = vld [vmem:[%s3 + $0x4c0] sm:$0xff]
  %v1290 = vld [vmem:[%s3 + $0x4c8] sm:$0xff]
  %v1291 = vld [vmem:[%s3 + $0x4d0] sm:$0xff]
  %v1292 = vld [vmem:[%s3 + $0x4d8] sm:$0xff]
  %v1293 = vld [vmem:[%s3 + $0x4e0] sm:$0xff]
  %v1294 = vld [vmem:[%s3 + $0x4e8] sm:$0xff]
  %v1295 = vld [vmem:[%s3 + $0x4f0] sm:$0xff]
  %v1296 = vld [vmem:[%s3 + $0x4f8] sm:$0xff]
  %v1297 = vpack.c.b16 %v1107, %v1105
  %v1298 = vpack.c.b16 %v1108, %v1106
  %v1299 = vpack.c.b16 %v1111, %v1109
  %v1300 = vpack.c.b16 %v1112, %v1110
  %v1301 = vpack.c.b16 %v1115, %v1113
  %v1302 = vpack.c.b16 %v1116, %v1114
  %v1303 = vpack.c.b16 %v1119, %v1117
  %v1304 = vpack.c.b16 %v1120, %v1118
  %v1305 = vpack.c.b16 %v1123, %v1121
  %v1306 = vpack.c.b16 %v1124, %v1122
  %v1307 = vpack.c.b16 %v1127, %v1125
  %v1308 = vpack.c.b16 %v1128, %v1126
  %v1309 = vpack.c.b16 %v1131, %v1129
  %v1310 = vpack.c.b16 %v1132, %v1130
  %v1311 = vpack.c.b16 %v1135, %v1133
  %v1312 = vpack.c.b16 %v1136, %v1134
  %v1489 = vunpack.c.l.b16 %v1137
  %v1490 = vunpack.c.h.b16 %v1137
  %v1491 = vunpack.c.l.b16 %v1138
  %v1492 = vunpack.c.h.b16 %v1138
  %v1493 = vunpack.c.l.b16 %v1139
  %v1494 = vunpack.c.h.b16 %v1139
  %v1495 = vunpack.c.l.b16 %v1140
  %v1496 = vunpack.c.h.b16 %v1140
  %v1497 = vunpack.c.l.b16 %v1141
  %v1498 = vunpack.c.h.b16 %v1141
  %v1499 = vunpack.c.l.b16 %v1142
  %v1500 = vunpack.c.h.b16 %v1142
  %v1501 = vunpack.c.l.b16 %v1143
  %v1502 = vunpack.c.h.b16 %v1143
  %v1503 = vunpack.c.l.b16 %v1144
  %v1504 = vunpack.c.h.b16 %v1144
  %v1505 = vunpack.c.l.b16 %v1145
  %v1506 = vunpack.c.h.b16 %v1145
  %v1507 = vunpack.c.l.b16 %v1146
  %v1508 = vunpack.c.h.b16 %v1146
  %v1509 = vunpack.c.l.b16 %v1147
  %v1510 = vunpack.c.h.b16 %v1147
  %v1511 = vunpack.c.l.b16 %v1148
  %v1512 = vunpack.c.h.b16 %v1148
  %v1513 = vunpack.c.l.b16 %v1149
  %v1514 = vunpack.c.h.b16 %v1149
  %v1515 = vunpack.c.l.b16 %v1150
  %v1516 = vunpack.c.h.b16 %v1150
  %v1517 = vunpack.c.l.b16 %v1151
  %v1518 = vunpack.c.h.b16 %v1151
  %v1519 = vunpack.c.l.b16 %v1152
  %v1520 = vunpack.c.h.b16 %v1152
  %v1521 = vunpack.c.l.b16 %v1153
  %v1522 = vunpack.c.h.b16 %v1153
  %v1523 = vunpack.c.l.b16 %v1154
  %v1524 = vunpack.c.h.b16 %v1154
  %v1525 = vunpack.c.l.b16 %v1155
  %v1526 = vunpack.c.h.b16 %v1155
  %v1527 = vunpack.c.l.b16 %v1156
  %v1528 = vunpack.c.h.b16 %v1156
  %v1529 = vunpack.c.l.b16 %v1157
  %v1530 = vunpack.c.h.b16 %v1157
  %v1531 = vunpack.c.l.b16 %v1158
  %v1532 = vunpack.c.h.b16 %v1158
  %v1533 = vunpack.c.l.b16 %v1159
  %v1534 = vunpack.c.h.b16 %v1159
  %v1535 = vunpack.c.l.b16 %v1160
  %v1536 = vunpack.c.h.b16 %v1160
  %v1537 = vunpack.c.l.b16 %v1161
  %v1538 = vunpack.c.h.b16 %v1161
  %v1539 = vunpack.c.l.b16 %v1162
  %v1540 = vunpack.c.h.b16 %v1162
  %v1541 = vunpack.c.l.b16 %v1163
  %v1542 = vunpack.c.h.b16 %v1163
  %v1543 = vunpack.c.l.b16 %v1164
  %v1544 = vunpack.c.h.b16 %v1164
  %v1545 = vunpack.c.l.b16 %v1165
  %v1546 = vunpack.c.h.b16 %v1165
  %v1547 = vunpack.c.l.b16 %v1166
  %v1548 = vunpack.c.h.b16 %v1166
  %v1549 = vunpack.c.l.b16 %v1167
  %v1550 = vunpack.c.h.b16 %v1167
  %v1551 = vunpack.c.l.b16 %v1168
  %v1552 = vunpack.c.h.b16 %v1168
  %v1553 = vunpack.c.l.b16 %v1169
  %v1554 = vunpack.c.h.b16 %v1169
  %v1555 = vunpack.c.l.b16 %v1170
  %v1556 = vunpack.c.h.b16 %v1170
  %v1557 = vunpack.c.l.b16 %v1171
  %v1558 = vunpack.c.h.b16 %v1171
  %v1559 = vunpack.c.l.b16 %v1172
  %v1560 = vunpack.c.h.b16 %v1172
  %v1561 = vunpack.c.l.b16 %v1173
  %v1562 = vunpack.c.h.b16 %v1173
  %v1563 = vunpack.c.l.b16 %v1174
  %v1564 = vunpack.c.h.b16 %v1174
  %v1565 = vunpack.c.l.b16 %v1175
  %v1566 = vunpack.c.h.b16 %v1175
  %v1567 = vunpack.c.l.b16 %v1176
  %v1568 = vunpack.c.h.b16 %v1176
  %v1569 = vunpack.c.l.b16 %v1177
  %v1570 = vunpack.c.h.b16 %v1177
  %v1571 = vunpack.c.l.b16 %v1178
  %v1572 = vunpack.c.h.b16 %v1178
  %v1573 = vunpack.c.l.b16 %v1179
  %v1574 = vunpack.c.h.b16 %v1179
  %v1575 = vunpack.c.l.b16 %v1180
  %v1576 = vunpack.c.h.b16 %v1180
  %v1577 = vunpack.c.l.b16 %v1181
  %v1578 = vunpack.c.h.b16 %v1181
  %v1579 = vunpack.c.l.b16 %v1182
  %v1580 = vunpack.c.h.b16 %v1182
  %v1581 = vunpack.c.l.b16 %v1183
  %v1582 = vunpack.c.h.b16 %v1183
  %v1583 = vunpack.c.l.b16 %v1184
  %v1584 = vunpack.c.h.b16 %v1184
  %v1585 = vunpack.c.l.b16 %v1185
  %v1586 = vunpack.c.h.b16 %v1185
  %v1587 = vunpack.c.l.b16 %v1186
  %v1588 = vunpack.c.h.b16 %v1186
  %v1589 = vunpack.c.l.b16 %v1187
  %v1590 = vunpack.c.h.b16 %v1187
  %v1591 = vunpack.c.l.b16 %v1188
  %v1592 = vunpack.c.h.b16 %v1188
  %v1593 = vunpack.c.l.b16 %v1189
  %v1594 = vunpack.c.h.b16 %v1189
  %v1595 = vunpack.c.l.b16 %v1190
  %v1596 = vunpack.c.h.b16 %v1190
  %v1597 = vunpack.c.l.b16 %v1191
  %v1598 = vunpack.c.h.b16 %v1191
  %v1599 = vunpack.c.l.b16 %v1192
  %v1600 = vunpack.c.h.b16 %v1192
  %v1601 = vunpack.c.l.b16 %v1193
  %v1602 = vunpack.c.h.b16 %v1193
  %v1603 = vunpack.c.l.b16 %v1194
  %v1604 = vunpack.c.h.b16 %v1194
  %v1605 = vunpack.c.l.b16 %v1195
  %v1606 = vunpack.c.h.b16 %v1195
  %v1607 = vunpack.c.l.b16 %v1196
  %v1608 = vunpack.c.h.b16 %v1196
  %v1609 = vunpack.c.l.b16 %v1197
  %v1610 = vunpack.c.h.b16 %v1197
  %v1611 = vunpack.c.l.b16 %v1198
  %v1612 = vunpack.c.h.b16 %v1198
  %v1613 = vunpack.c.l.b16 %v1199
  %v1614 = vunpack.c.h.b16 %v1199
  %v1615 = vunpack.c.l.b16 %v1200
  %v1616 = vunpack.c.h.b16 %v1200
  %v1617 = vunpack.c.l.b16 %v1201
  %v1618 = vunpack.c.h.b16 %v1201
  %v1619 = vunpack.c.l.b16 %v1202
  %v1620 = vunpack.c.h.b16 %v1202
  %v1621 = vunpack.c.l.b16 %v1203
  %v1622 = vunpack.c.h.b16 %v1203
  %v1623 = vunpack.c.l.b16 %v1204
  %v1624 = vunpack.c.h.b16 %v1204
  %v1625 = vunpack.c.l.b16 %v1205
  %v1626 = vunpack.c.h.b16 %v1205
  %v1627 = vunpack.c.l.b16 %v1206
  %v1628 = vunpack.c.h.b16 %v1206
  %v1629 = vunpack.c.l.b16 %v1207
  %v1630 = vunpack.c.h.b16 %v1207
  %v1631 = vunpack.c.l.b16 %v1208
  %v1632 = vunpack.c.h.b16 %v1208
  %v1633 = vunpack.c.l.b16 %v1209
  %v1634 = vunpack.c.h.b16 %v1209
  %v1635 = vunpack.c.l.b16 %v1210
  %v1636 = vunpack.c.h.b16 %v1210
  %v1637 = vunpack.c.l.b16 %v1211
  %v1638 = vunpack.c.h.b16 %v1211
  %v1639 = vunpack.c.l.b16 %v1212
  %v1640 = vunpack.c.h.b16 %v1212
  %v1641 = vunpack.c.l.b16 %v1213
  %v1642 = vunpack.c.h.b16 %v1213
  %v1643 = vunpack.c.l.b16 %v1214
  %v1644 = vunpack.c.h.b16 %v1214
  %v1645 = vunpack.c.l.b16 %v1215
  %v1646 = vunpack.c.h.b16 %v1215
  %v1647 = vunpack.c.l.b16 %v1216
  %v1648 = vunpack.c.h.b16 %v1216
  %v1649 = vunpack.c.l.b16 %v1217
  %v1650 = vunpack.c.h.b16 %v1217
  %v1651 = vunpack.c.l.b16 %v1218
  %v1652 = vunpack.c.h.b16 %v1218
  %v1653 = vunpack.c.l.b16 %v1219
  %v1654 = vunpack.c.h.b16 %v1219
  %v1655 = vunpack.c.l.b16 %v1220
  %v1656 = vunpack.c.h.b16 %v1220
  %v1657 = vunpack.c.l.b16 %v1221
  %v1658 = vunpack.c.h.b16 %v1221
  %v1659 = vunpack.c.l.b16 %v1222
  %v1660 = vunpack.c.h.b16 %v1222
  %v1661 = vunpack.c.l.b16 %v1223
  %v1662 = vunpack.c.h.b16 %v1223
  %v1663 = vunpack.c.l.b16 %v1224
  %v1664 = vunpack.c.h.b16 %v1224
  %v1665 = vunpack.c.l.b16 %v1225
  %v1666 = vunpack.c.h.b16 %v1225
  %v1667 = vunpack.c.l.b16 %v1226
  %v1668 = vunpack.c.h.b16 %v1226
  %v1669 = vunpack.c.l.b16 %v1227
  %v1670 = vunpack.c.h.b16 %v1227
  %v1671 = vunpack.c.l.b16 %v1228
  %v1672 = vunpack.c.h.b16 %v1228
  %v1673 = vunpack.c.l.b16 %v1229
  %v1674 = vunpack.c.h.b16 %v1229
  %v1675 = vunpack.c.l.b16 %v1230
  %v1676 = vunpack.c.h.b16 %v1230
  %v1677 = vunpack.c.l.b16 %v1231
  %v1678 = vunpack.c.h.b16 %v1231
  %v1679 = vunpack.c.l.b16 %v1232
  %v1680 = vunpack.c.h.b16 %v1232
  %v1681 = vunpack.c.l.b16 %v1233
  %v1682 = vunpack.c.h.b16 %v1233
  %v1683 = vunpack.c.l.b16 %v1234
  %v1684 = vunpack.c.h.b16 %v1234
  %v1685 = vunpack.c.l.b16 %v1235
  %v1686 = vunpack.c.h.b16 %v1235
  %v1687 = vunpack.c.l.b16 %v1236
  %v1688 = vunpack.c.h.b16 %v1236
  %v1689 = vunpack.c.l.b16 %v1237
  %v1690 = vunpack.c.h.b16 %v1237
  %v1691 = vunpack.c.l.b16 %v1238
  %v1692 = vunpack.c.h.b16 %v1238
  %v1693 = vunpack.c.l.b16 %v1239
  %v1694 = vunpack.c.h.b16 %v1239
  %v1695 = vunpack.c.l.b16 %v1240
  %v1696 = vunpack.c.h.b16 %v1240
  %v1697 = vunpack.c.l.b16 %v1241
  %v1698 = vunpack.c.h.b16 %v1241
  %v1699 = vunpack.c.l.b16 %v1242
  %v1700 = vunpack.c.h.b16 %v1242
  %v1701 = vunpack.c.l.b16 %v1243
  %v1702 = vunpack.c.h.b16 %v1243
  %v1703 = vunpack.c.l.b16 %v1244
  %v1704 = vunpack.c.h.b16 %v1244
  %v1705 = vunpack.c.l.b16 %v1245
  %v1706 = vunpack.c.h.b16 %v1245
  %v1707 = vunpack.c.l.b16 %v1246
  %v1708 = vunpack.c.h.b16 %v1246
  %v1709 = vunpack.c.l.b16 %v1247
  %v1710 = vunpack.c.h.b16 %v1247
  %v1711 = vunpack.c.l.b16 %v1248
  %v1712 = vunpack.c.h.b16 %v1248
  %v1713 = vunpack.c.l.b16 %v1249
  %v1714 = vunpack.c.h.b16 %v1249
  %v1715 = vunpack.c.l.b16 %v1250
  %v1716 = vunpack.c.h.b16 %v1250
  %v1717 = vunpack.c.l.b16 %v1251
  %v1718 = vunpack.c.h.b16 %v1251
  %v1719 = vunpack.c.l.b16 %v1252
  %v1720 = vunpack.c.h.b16 %v1252
  %v1721 = vunpack.c.l.b16 %v1253
  %v1722 = vunpack.c.h.b16 %v1253
  %v1723 = vunpack.c.l.b16 %v1254
  %v1724 = vunpack.c.h.b16 %v1254
  %v1725 = vunpack.c.l.b16 %v1255
  %v1726 = vunpack.c.h.b16 %v1255
  %v1727 = vunpack.c.l.b16 %v1256
  %v1728 = vunpack.c.h.b16 %v1256
  %v1729 = vunpack.c.l.b16 %v1257
  %v1730 = vunpack.c.h.b16 %v1257
  %v1731 = vunpack.c.l.b16 %v1258
  %v1732 = vunpack.c.h.b16 %v1258
  %v1733 = vunpack.c.l.b16 %v1259
  %v1734 = vunpack.c.h.b16 %v1259
  %v1735 = vunpack.c.l.b16 %v1260
  %v1736 = vunpack.c.h.b16 %v1260
  %v1737 = vunpack.c.l.b16 %v1261
  %v1738 = vunpack.c.h.b16 %v1261
  %v1739 = vunpack.c.l.b16 %v1262
  %v1740 = vunpack.c.h.b16 %v1262
  %v1741 = vunpack.c.l.b16 %v1263
  %v1742 = vunpack.c.h.b16 %v1263
  %v1743 = vunpack.c.l.b16 %v1264
  %v1744 = vunpack.c.h.b16 %v1264
  %v1745 = vunpack.c.l.b16 %v1265
  %v1746 = vunpack.c.h.b16 %v1265
  %v1747 = vunpack.c.l.b16 %v1266
  %v1748 = vunpack.c.h.b16 %v1266
  %v1749 = vunpack.c.l.b16 %v1267
  %v1750 = vunpack.c.h.b16 %v1267
  %v1751 = vunpack.c.l.b16 %v1268
  %v1752 = vunpack.c.h.b16 %v1268
  %v1753 = vunpack.c.l.b16 %v1269
  %v1754 = vunpack.c.h.b16 %v1269
  %v1755 = vunpack.c.l.b16 %v1270
  %v1756 = vunpack.c.h.b16 %v1270
  %v1757 = vunpack.c.l.b16 %v1271
  %v1758 = vunpack.c.h.b16 %v1271
  %v1759 = vunpack.c.l.b16 %v1272
  %v1760 = vunpack.c.h.b16 %v1272
  %v1761 = vunpack.c.l.b16 %v1273
  %v1762 = vunpack.c.h.b16 %v1273
  %v1763 = vunpack.c.l.b16 %v1274
  %v1764 = vunpack.c.h.b16 %v1274
  %v1765 = vunpack.c.l.b16 %v1275
  %v1766 = vunpack.c.h.b16 %v1275
  %v1767 = vunpack.c.l.b16 %v1276
  %v1768 = vunpack.c.h.b16 %v1276
  %v1769 = vunpack.c.l.b16 %v1277
  %v1770 = vunpack.c.h.b16 %v1277
  %v1771 = vunpack.c.l.b16 %v1278
  %v1772 = vunpack.c.h.b16 %v1278
  %v1773 = vunpack.c.l.b16 %v1279
  %v1774 = vunpack.c.h.b16 %v1279
  %v1775 = vunpack.c.l.b16 %v1280
  %v1776 = vunpack.c.h.b16 %v1280
  %v1777 = vunpack.c.l.b16 %v1281
  %v1778 = vunpack.c.h.b16 %v1281
  %v1779 = vunpack.c.l.b16 %v1282
  %v1780 = vunpack.c.h.b16 %v1282
  %v1781 = vunpack.c.l.b16 %v1283
  %v1782 = vunpack.c.h.b16 %v1283
  %v1783 = vunpack.c.l.b16 %v1284
  %v1784 = vunpack.c.h.b16 %v1284
  %v1785 = vunpack.c.l.b16 %v1285
  %v1786 = vunpack.c.h.b16 %v1285
  %v1787 = vunpack.c.l.b16 %v1286
  %v1788 = vunpack.c.h.b16 %v1286
  %v1789 = vunpack.c.l.b16 %v1287
  %v1790 = vunpack.c.h.b16 %v1287
  %v1791 = vunpack.c.l.b16 %v1288
  %v1792 = vunpack.c.h.b16 %v1288
  %v1793 = vunpack.c.l.b16 %v1289
  %v1794 = vunpack.c.h.b16 %v1289
  %v1795 = vunpack.c.l.b16 %v1290
  %v1796 = vunpack.c.h.b16 %v1290
  %v1797 = vunpack.c.l.b16 %v1291
  %v1798 = vunpack.c.h.b16 %v1291
  %v1799 = vunpack.c.l.b16 %v1292
  %v1800 = vunpack.c.h.b16 %v1292
  %v1801 = vunpack.c.l.b16 %v1293
  %v1802 = vunpack.c.h.b16 %v1293
  %v1803 = vunpack.c.l.b16 %v1294
  %v1804 = vunpack.c.h.b16 %v1294
  %v1805 = vunpack.c.l.b16 %v1295
  %v1806 = vunpack.c.h.b16 %v1295
  %v1807 = vunpack.c.l.b16 %v1296
  %v1808 = vunpack.c.h.b16 %v1296
  %v1809 = vpack.c.b16 %v1499, %v1489
  %v1810 = vpack.c.b16 %v1500, %v1490
  %v1811 = vpack.c.b16 %v1501, %v1491
  %v1812 = vpack.c.b16 %v1502, %v1492
  %v1813 = vpack.c.b16 %v1503, %v1493
  %v1814 = vpack.c.b16 %v1504, %v1494
  %v1815 = vpack.c.b16 %v1505, %v1495
  %v1816 = vpack.c.b16 %v1506, %v1496
  %v1817 = vpack.c.b16 %v1507, %v1497
  %v1818 = vpack.c.b16 %v1508, %v1498
  %v1819 = vpack.c.b16 %v1519, %v1509
  %v1820 = vpack.c.b16 %v1520, %v1510
  %v1821 = vpack.c.b16 %v1521, %v1511
  %v1822 = vpack.c.b16 %v1522, %v1512
  %v1823 = vpack.c.b16 %v1523, %v1513
  %v1824 = vpack.c.b16 %v1524, %v1514
  %v1825 = vpack.c.b16 %v1525, %v1515
  %v1826 = vpack.c.b16 %v1526, %v1516
  %v1827 = vpack.c.b16 %v1527, %v1517
  %v1828 = vpack.c.b16 %v1528, %v1518
  %v1829 = vpack.c.b16 %v1539, %v1529
  %v1830 = vpack.c.b16 %v1540, %v1530
  %v1831 = vpack.c.b16 %v1541, %v1531
  %v1832 = vpack.c.b16 %v1542, %v1532
  %v1833 = vpack.c.b16 %v1543, %v1533
  %v1834 = vpack.c.b16 %v1544, %v1534
  %v1835 = vpack.c.b16 %v1545, %v1535
  %v1836 = vpack.c.b16 %v1546, %v1536
  %v1837 = vpack.c.b16 %v1547, %v1537
  %v1838 = vpack.c.b16 %v1548, %v1538
  %v1839 = vpack.c.b16 %v1559, %v1549
  %v1840 = vpack.c.b16 %v1560, %v1550
  %v1841 = vpack.c.b16 %v1561, %v1551
  %v1842 = vpack.c.b16 %v1562, %v1552
  %v1843 = vpack.c.b16 %v1563, %v1553
  %v1844 = vpack.c.b16 %v1564, %v1554
  %v1845 = vpack.c.b16 %v1565, %v1555
  %v1846 = vpack.c.b16 %v1566, %v1556
  %v1847 = vpack.c.b16 %v1567, %v1557
  %v1848 = vpack.c.b16 %v1568, %v1558
  %v1849 = vpack.c.b16 %v1579, %v1569
  %v1850 = vpack.c.b16 %v1580, %v1570
  %v1851 = vpack.c.b16 %v1581, %v1571
  %v1852 = vpack.c.b16 %v1582, %v1572
  %v1853 = vpack.c.b16 %v1583, %v1573
  %v1854 = vpack.c.b16 %v1584, %v1574
  %v1855 = vpack.c.b16 %v1585, %v1575
  %v1856 = vpack.c.b16 %v1586, %v1576
  %v1857 = vpack.c.b16 %v1587, %v1577
  %v1858 = vpack.c.b16 %v1588, %v1578
  %v1859 = vpack.c.b16 %v1599, %v1589
  %v1860 = vpack.c.b16 %v1600, %v1590
  %v1861 = vpack.c.b16 %v1601, %v1591
  %v1862 = vpack.c.b16 %v1602, %v1592
  %v1863 = vpack.c.b16 %v1603, %v1593
  %v1864 = vpack.c.b16 %v1604, %v1594
  %v1865 = vpack.c.b16 %v1605, %v1595
  %v1866 = vpack.c.b16 %v1606, %v1596
  %v1867 = vpack.c.b16 %v1607, %v1597
  %v1868 = vpack.c.b16 %v1608, %v1598
  %v1869 = vpack.c.b16 %v1619, %v1609
  %v1870 = vpack.c.b16 %v1620, %v1610
  %v1871 = vpack.c.b16 %v1621, %v1611
  %v1872 = vpack.c.b16 %v1622, %v1612
  %v1873 = vpack.c.b16 %v1623, %v1613
  %v1874 = vpack.c.b16 %v1624, %v1614
  %v1875 = vpack.c.b16 %v1625, %v1615
  %v1876 = vpack.c.b16 %v1626, %v1616
  %v1877 = vpack.c.b16 %v1627, %v1617
  %v1878 = vpack.c.b16 %v1628, %v1618
  %v1879 = vpack.c.b16 %v1639, %v1629
  %v1880 = vpack.c.b16 %v1640, %v1630
  %v1881 = vpack.c.b16 %v1641, %v1631
  %v1882 = vpack.c.b16 %v1642, %v1632
  %v1883 = vpack.c.b16 %v1643, %v1633
  %v1884 = vpack.c.b16 %v1644, %v1634
  %v1885 = vpack.c.b16 %v1645, %v1635
  %v1886 = vpack.c.b16 %v1646, %v1636
  %v1887 = vpack.c.b16 %v1647, %v1637
  %v1888 = vpack.c.b16 %v1648, %v1638
  %v1889 = vpack.c.b16 %v1659, %v1649
  %v1890 = vpack.c.b16 %v1660, %v1650
  %v1891 = vpack.c.b16 %v1661, %v1651
  %v1892 = vpack.c.b16 %v1662, %v1652
  %v1893 = vpack.c.b16 %v1663, %v1653
  %v1894 = vpack.c.b16 %v1664, %v1654
  %v1895 = vpack.c.b16 %v1665, %v1655
  %v1896 = vpack.c.b16 %v1666, %v1656
  %v1897 = vpack.c.b16 %v1667, %v1657
  %v1898 = vpack.c.b16 %v1668, %v1658
  %v1899 = vpack.c.b16 %v1679, %v1669
  %v1900 = vpack.c.b16 %v1680, %v1670
  %v1901 = vpack.c.b16 %v1681, %v1671
  %v1902 = vpack.c.b16 %v1682, %v1672
  %v1903 = vpack.c.b16 %v1683, %v1673
  %v1904 = vpack.c.b16 %v1684, %v1674
  %v1905 = vpack.c.b16 %v1685, %v1675
  %v1906 = vpack.c.b16 %v1686, %v1676
  %v1907 = vpack.c.b16 %v1687, %v1677
  %v1908 = vpack.c.b16 %v1688, %v1678
  %v1909 = vpack.c.b16 %v1699, %v1689
  %v1910 = vpack.c.b16 %v1700, %v1690
  %v1911 = vpack.c.b16 %v1701, %v1691
  %v1912 = vpack.c.b16 %v1702, %v1692
  %v1913 = vpack.c.b16 %v1703, %v1693
  %v1914 = vpack.c.b16 %v1704, %v1694
  %v1915 = vpack.c.b16 %v1705, %v1695
  %v1916 = vpack.c.b16 %v1706, %v1696
  %v1917 = vpack.c.b16 %v1707, %v1697
  %v1918 = vpack.c.b16 %v1708, %v1698
  %v1919 = vpack.c.b16 %v1719, %v1709
  %v1920 = vpack.c.b16 %v1720, %v1710
  %v1921 = vpack.c.b16 %v1721, %v1711
  %v1922 = vpack.c.b16 %v1722, %v1712
  %v1923 = vpack.c.b16 %v1723, %v1713
  %v1924 = vpack.c.b16 %v1724, %v1714
  %v1925 = vpack.c.b16 %v1725, %v1715
  %v1926 = vpack.c.b16 %v1726, %v1716
  %v1927 = vpack.c.b16 %v1727, %v1717
  %v1928 = vpack.c.b16 %v1728, %v1718
  %v1929 = vpack.c.b16 %v1739, %v1729
  %v1930 = vpack.c.b16 %v1740, %v1730
  %v1931 = vpack.c.b16 %v1741, %v1731
  %v1932 = vpack.c.b16 %v1742, %v1732
  %v1933 = vpack.c.b16 %v1743, %v1733
  %v1934 = vpack.c.b16 %v1744, %v1734
  %v1935 = vpack.c.b16 %v1745, %v1735
  %v1936 = vpack.c.b16 %v1746, %v1736
  %v1937 = vpack.c.b16 %v1747, %v1737
  %v1938 = vpack.c.b16 %v1748, %v1738
  %v1939 = vpack.c.b16 %v1759, %v1749
  %v1940 = vpack.c.b16 %v1760, %v1750
  %v1941 = vpack.c.b16 %v1761, %v1751
  %v1942 = vpack.c.b16 %v1762, %v1752
  %v1943 = vpack.c.b16 %v1763, %v1753
  %v1944 = vpack.c.b16 %v1764, %v1754
  %v1945 = vpack.c.b16 %v1765, %v1755
  %v1946 = vpack.c.b16 %v1766, %v1756
  %v1947 = vpack.c.b16 %v1767, %v1757
  %v1948 = vpack.c.b16 %v1768, %v1758
  %v1949 = vpack.c.b16 %v1779, %v1769
  %v1950 = vpack.c.b16 %v1780, %v1770
  %v1951 = vpack.c.b16 %v1781, %v1771
  %v1952 = vpack.c.b16 %v1782, %v1772
  %v1953 = vpack.c.b16 %v1783, %v1773
  %v1954 = vpack.c.b16 %v1784, %v1774
  %v1955 = vpack.c.b16 %v1785, %v1775
  %v1956 = vpack.c.b16 %v1786, %v1776
  %v1957 = vpack.c.b16 %v1787, %v1777
  %v1958 = vpack.c.b16 %v1788, %v1778
  %v1959 = vpack.c.b16 %v1799, %v1789
  %v1960 = vpack.c.b16 %v1800, %v1790
  %v1961 = vpack.c.b16 %v1801, %v1791
  %v1962 = vpack.c.b16 %v1802, %v1792
  %v1963 = vpack.c.b16 %v1803, %v1793
  %v1964 = vpack.c.b16 %v1804, %v1794
  %v1965 = vpack.c.b16 %v1805, %v1795
  %v1966 = vpack.c.b16 %v1806, %v1796
  %v1967 = vpack.c.b16 %v1807, %v1797
  %v1968 = vpack.c.b16 %v1808, %v1798
  %2129 = vmatprep.subr.bf16.mxu0 %v1880
  %2130 = vmatpush1.bf16.msra.mxu0 %v1879
  %2131 = vmatprep.subr.bf16.mxu0 %v1870
  %2132 = vmatpush1.bf16.msra.mxu0 %v1869
  %2133 = vmatprep.subr.bf16.mxu0 %v1860
  %2134 = vmatpush1.bf16.msra.mxu0 %v1859
  %2135 = vmatprep.subr.bf16.mxu0 %v1850
  %2136 = vmatpush1.bf16.msra.mxu0 %v1849
  %2137 = vmatprep.subr.bf16.mxu0 %v1840
  %2138 = vmatpush1.bf16.msra.mxu0 %v1839
  %2139 = vmatprep.subr.bf16.mxu0 %v1830
  %2140 = vmatpush1.bf16.msra.mxu0 %v1829
  %2141 = vmatprep.subr.bf16.mxu0 %v1820
  %2142 = vmatpush1.bf16.msra.mxu0 %v1819
  %2143 = vmatprep.subr.bf16.mxu0 %v1810
  %2144 = vmatpush1.bf16.msra.mxu0 %v1809
  %2145 = vmatprep.subr.bf16.mxu0 %v1960
  %2146 = vmatpush2.bf16.msra.mxu0 %v1959
  %2147 = vmatprep.subr.bf16.mxu0 %v1950
  %2148 = vmatpush2.bf16.msra.mxu0 %v1949
  %2149 = vmatprep.subr.bf16.mxu0 %v1940
  %2150 = vmatpush2.bf16.msra.mxu0 %v1939
  %2151 = vmatprep.subr.bf16.mxu0 %v1930
  %2152 = vmatpush2.bf16.msra.mxu0 %v1929
  %2153 = vmatprep.subr.bf16.mxu0 %v1920
  %2154 = vmatpush2.bf16.msra.mxu0 %v1919
  %2155 = vmatprep.subr.bf16.mxu0 %v1910
  %2156 = vmatpush2.bf16.msra.mxu0 %v1909
  %2157 = vmatprep.subr.bf16.mxu0 %v1900
  %2158 = vmatpush2.bf16.msra.mxu0 %v1899
  %2159 = vmatprep.subr.bf16.mxu0 %v1890
  %2160 = vmatpush2.bf16.msra.mxu0 %v1889
  %2161 = vmatprep.mubr.bf16.mxu0 %v1298
  %2162 = vmatmul.mubr.bf16.gmra.mxu0 %v1297
  %v2163 = vpop.f32.mrf.mxu0
  %v2164 = vadd.f32 0.0, %v2163
  %v2165 = vpop.f32.mrf.mxu0
  %v2166 = vadd.f32 0.0, %v2165
  %v2167 = vpop.f32.mrf.mxu0
  %v2168 = vadd.f32 0.0, %v2167
  %v2169 = vpop.f32.mrf.mxu0
  %v2170 = vadd.f32 0.0, %v2169
  %2171 = vmatprep.mubr.bf16.mxu0 %v1300
  %2172 = vmatmul.mubr.bf16.gmra.mxu0 %v1299
  %v2173 = vpop.f32.mrf.mxu0
  %v2174 = vadd.f32 0.0, %v2173
  %v2175 = vpop.f32.mrf.mxu0
  %v2176 = vadd.f32 0.0, %v2175
  %v2177 = vpop.f32.mrf.mxu0
  %v2178 = vadd.f32 0.0, %v2177
  %v2179 = vpop.f32.mrf.mxu0
  %v2180 = vadd.f32 0.0, %v2179
  %2181 = vmatprep.mubr.bf16.mxu0 %v1302
  %2182 = vmatmul.mubr.bf16.gmra.mxu0 %v1301
  %v2183 = vpop.f32.mrf.mxu0
  %v2184 = vpop.f32.mrf.mxu0
  %v2185 = vpop.f32.mrf.mxu0
  %v2186 = vpop.f32.mrf.mxu0
  %2187 = vmatprep.mubr.bf16.mxu0 %v1304
  %2188 = vmatmul.mubr.bf16.gmra.mxu0 %v1303
  %v2189 = vpop.f32.mrf.mxu0
  %v2190 = vpop.f32.mrf.mxu0
  %v2191 = vpop.f32.mrf.mxu0
  %v2192 = vpop.f32.mrf.mxu0
  %2193 = vmatprep.mubr.bf16.mxu0 %v1306
  %2194 = vmatmul.mubr.bf16.gmra.mxu0 %v1305
  %v2195 = vpop.f32.mrf.mxu0
  %v2196 = vadd.f32 0.0, %v2195
  %v2197 = vpop.f32.mrf.mxu0
  %v2198 = vadd.f32 0.0, %v2197
  %v2199 = vpop.f32.mrf.mxu0
  %v2200 = vadd.f32 0.0, %v2199
  %v2201 = vpop.f32.mrf.mxu0
  %v2202 = vadd.f32 0.0, %v2201
  %2203 = vmatprep.mubr.bf16.mxu0 %v1308
  %2204 = vmatmul.mubr.bf16.gmra.mxu0 %v1307
  %v2205 = vpop.f32.mrf.mxu0
  %v2206 = vadd.f32 0.0, %v2205
  %v2207 = vpop.f32.mrf.mxu0
  %v2208 = vadd.f32 0.0, %v2207
  %v2209 = vpop.f32.mrf.mxu0
  %v2210 = vadd.f32 0.0, %v2209
  %v2211 = vpop.f32.mrf.mxu0
  %v2212 = vadd.f32 0.0, %v2211
  %2213 = vmatprep.mubr.bf16.mxu0 %v1310
  %2214 = vmatmul.mubr.bf16.gmra.mxu0 %v1309
  %v2215 = vpop.f32.mrf.mxu0
  %v2216 = vpop.f32.mrf.mxu0
  %v2217 = vpop.f32.mrf.mxu0
  %v2218 = vpop.f32.mrf.mxu0
  %2219 = vmatprep.mubr.bf16.mxu0 %v1312
  %2220 = vmatmul.mubr.bf16.gmra.mxu0 %v1311
  %v2221 = vpop.f32.mrf.mxu0
  %v2222 = vpop.f32.mrf.mxu0
  %v2223 = vpop.f32.mrf.mxu0
  %v2224 = vpop.f32.mrf.mxu0
  %2225 = vdwg.mxu0
  %2226 = vmatprep.subr.bf16.mxu0 %v1882
  %2227 = vmatpush1.bf16.msra.mxu0 %v1881
  %2228 = vmatprep.subr.bf16.mxu0 %v1872
  %2229 = vmatpush1.bf16.msra.mxu0 %v1871
  %2230 = vmatprep.subr.bf16.mxu0 %v1862
  %2231 = vmatpush1.bf16.msra.mxu0 %v1861
  %2232 = vmatprep.subr.bf16.mxu0 %v1852
  %2233 = vmatpush1.bf16.msra.mxu0 %v1851
  %2234 = vmatprep.subr.bf16.mxu0 %v1842
  %2235 = vmatpush1.bf16.msra.mxu0 %v1841
  %2236 = vmatprep.subr.bf16.mxu0 %v1832
  %2237 = vmatpush1.bf16.msra.mxu0 %v1831
  %2238 = vmatprep.subr.bf16.mxu0 %v1822
  %2239 = vmatpush1.bf16.msra.mxu0 %v1821
  %2240 = vmatprep.subr.bf16.mxu0 %v1812
  %2241 = vmatpush1.bf16.msra.mxu0 %v1811
  %2242 = vmatprep.subr.bf16.mxu0 %v1962
  %2243 = vmatpush2.bf16.msra.mxu0 %v1961
  %2244 = vmatprep.subr.bf16.mxu0 %v1952
  %2245 = vmatpush2.bf16.msra.mxu0 %v1951
  %2246 = vmatprep.subr.bf16.mxu0 %v1942
  %2247 = vmatpush2.bf16.msra.mxu0 %v1941
  %2248 = vmatprep.subr.bf16.mxu0 %v1932
  %2249 = vmatpush2.bf16.msra.mxu0 %v1931
  %2250 = vmatprep.subr.bf16.mxu0 %v1922
  %2251 = vmatpush2.bf16.msra.mxu0 %v1921
  %2252 = vmatprep.subr.bf16.mxu0 %v1912
  %2253 = vmatpush2.bf16.msra.mxu0 %v1911
  %2254 = vmatprep.subr.bf16.mxu0 %v1902
  %2255 = vmatpush2.bf16.msra.mxu0 %v1901
  %2256 = vmatprep.subr.bf16.mxu0 %v1892
  %2257 = vmatpush2.bf16.msra.mxu0 %v1891
  %2258 = vmatprep.mubr.bf16.mxu0 %v1298
  %2259 = vmatmul.mubr.bf16.gmra.mxu0 %v1297
  %v2260 = vpop.f32.mrf.mxu0
  %v2261 = vpop.f32.mrf.mxu0
  %v2262 = vpop.f32.mrf.mxu0
  %v2263 = vadd.f32 0.0, %v2262
  %v2264 = vpop.f32.mrf.mxu0
  %v2265 = vadd.f32 0.0, %v2264
  %2266 = vmatprep.mubr.bf16.mxu0 %v1300
  %2267 = vmatmul.mubr.bf16.gmra.mxu0 %v1299
  %v2268 = vpop.f32.mrf.mxu0
  %v2269 = vadd.f32 0.0, %v2268
  %v2270 = vpop.f32.mrf.mxu0
  %v2271 = vadd.f32 0.0, %v2270
  %v2272 = vpop.f32.mrf.mxu0
  %v2273 = vadd.f32 0.0, %v2272
  %v2274 = vpop.f32.mrf.mxu0
  %v2275 = vadd.f32 0.0, %v2274
  %2276 = vmatprep.mubr.bf16.mxu0 %v1302
  %2277 = vmatmul.mubr.bf16.gmra.mxu0 %v1301
  %v2278 = vpop.f32.mrf.mxu0
  %v2279 = vadd.f32 0.0, %v2278
  %v2280 = vpop.f32.mrf.mxu0
  %v2281 = vadd.f32 0.0, %v2280
  %v2282 = vpop.f32.mrf.mxu0
  %v2283 = vpop.f32.mrf.mxu0
  %2284 = vmatprep.mubr.bf16.mxu0 %v1304
  %2285 = vmatmul.mubr.bf16.gmra.mxu0 %v1303
  %v2286 = vpop.f32.mrf.mxu0
  %v2287 = vpop.f32.mrf.mxu0
  %v2288 = vpop.f32.mrf.mxu0
  %v2289 = vpop.f32.mrf.mxu0
  %2290 = vmatprep.mubr.bf16.mxu0 %v1306
  %2291 = vmatmul.mubr.bf16.gmra.mxu0 %v1305
  %v2292 = vpop.f32.mrf.mxu0
  %v2293 = vadd.f32 0.0, %v2292
  %v2294 = vpop.f32.mrf.mxu0
  %v2295 = vadd.f32 0.0, %v2294
  %v2296 = vpop.f32.mrf.mxu0
  %v2297 = vadd.f32 0.0, %v2296
  %v2298 = vpop.f32.mrf.mxu0
  %v2299 = vadd.f32 0.0, %v2298
  %2300 = vmatprep.mubr.bf16.mxu0 %v1308
  %2301 = vmatmul.mubr.bf16.gmra.mxu0 %v1307
  %v2302 = vpop.f32.mrf.mxu0
  %v2303 = vadd.f32 0.0, %v2302
  %v2304 = vpop.f32.mrf.mxu0
  %v2305 = vadd.f32 0.0, %v2304
  %v2306 = vpop.f32.mrf.mxu0
  %v2307 = vadd.f32 0.0, %v2306
  %v2308 = vpop.f32.mrf.mxu0
  %v2309 = vadd.f32 0.0, %v2308
  %2310 = vmatprep.mubr.bf16.mxu0 %v1310
  %2311 = vmatmul.mubr.bf16.gmra.mxu0 %v1309
  %v2312 = vpop.f32.mrf.mxu0
  %v2313 = vpop.f32.mrf.mxu0
  %v2314 = vpop.f32.mrf.mxu0
  %v2315 = vpop.f32.mrf.mxu0
  %2316 = vmatprep.mubr.bf16.mxu0 %v1312
  %2317 = vmatmul.mubr.bf16.gmra.mxu0 %v1311
  %v2318 = vpop.f32.mrf.mxu0
  %v2319 = vpop.f32.mrf.mxu0
  %v2320 = vpop.f32.mrf.mxu0
  %v2321 = vpop.f32.mrf.mxu0
  %2322 = vdwg.mxu0
  %2323 = vmatprep.subr.bf16.mxu0 %v1884
  %2324 = vmatpush1.bf16.msra.mxu0 %v1883
  %2325 = vmatprep.subr.bf16.mxu0 %v1874
  %2326 = vmatpush1.bf16.msra.mxu0 %v1873
  %2327 = vmatprep.subr.bf16.mxu0 %v1864
  %2328 = vmatpush1.bf16.msra.mxu0 %v1863
  %2329 = vmatprep.subr.bf16.mxu0 %v1854
  %2330 = vmatpush1.bf16.msra.mxu0 %v1853
  %2331 = vmatprep.subr.bf16.mxu0 %v1844
  %2332 = vmatpush1.bf16.msra.mxu0 %v1843
  %2333 = vmatprep.subr.bf16.mxu0 %v1834
  %2334 = vmatpush1.bf16.msra.mxu0 %v1833
  %2335 = vmatprep.subr.bf16.mxu0 %v1824
  %2336 = vmatpush1.bf16.msra.mxu0 %v1823
  %2337 = vmatprep.subr.bf16.mxu0 %v1814
  %2338 = vmatpush1.bf16.msra.mxu0 %v1813
  %2339 = vmatprep.subr.bf16.mxu0 %v1964
  %2340 = vmatpush2.bf16.msra.mxu0 %v1963
  %2341 = vmatprep.subr.bf16.mxu0 %v1954
  %2342 = vmatpush2.bf16.msra.mxu0 %v1953
  %2343 = vmatprep.subr.bf16.mxu0 %v1944
  %2344 = vmatpush2.bf16.msra.mxu0 %v1943
  %2345 = vmatprep.subr.bf16.mxu0 %v1934
  %2346 = vmatpush2.bf16.msra.mxu0 %v1933
  %2347 = vmatprep.subr.bf16.mxu0 %v1924
  %2348 = vmatpush2.bf16.msra.mxu0 %v1923
  %2349 = vmatprep.subr.bf16.mxu0 %v1914
  %2350 = vmatpush2.bf16.msra.mxu0 %v1913
  %2351 = vmatprep.subr.bf16.mxu0 %v1904
  %2352 = vmatpush2.bf16.msra.mxu0 %v1903
  %2353 = vmatprep.subr.bf16.mxu0 %v1894
  %2354 = vmatpush2.bf16.msra.mxu0 %v1893
  %2355 = vmatprep.mubr.bf16.mxu0 %v1298
  %2356 = vmatmul.mubr.bf16.gmra.mxu0 %v1297
  %v2357 = vpop.f32.mrf.mxu0
  %v2358 = vpop.f32.mrf.mxu0
  %v2359 = vpop.f32.mrf.mxu0
  %v2360 = vadd.f32 0.0, %v2359
  %v2361 = vpop.f32.mrf.mxu0
  %v2362 = vadd.f32 0.0, %v2361
  %2363 = vmatprep.mubr.bf16.mxu0 %v1300
  %2364 = vmatmul.mubr.bf16.gmra.mxu0 %v1299
  %v2365 = vpop.f32.mrf.mxu0
  %v2366 = vadd.f32 0.0, %v2365
  %v2367 = vpop.f32.mrf.mxu0
  %v2368 = vadd.f32 0.0, %v2367
  %v2369 = vpop.f32.mrf.mxu0
  %v2370 = vadd.f32 0.0, %v2369
  %v2371 = vpop.f32.mrf.mxu0
  %v2372 = vadd.f32 0.0, %v2371
  %2373 = vmatprep.mubr.bf16.mxu0 %v1302
  %2374 = vmatmul.mubr.bf16.gmra.mxu0 %v1301
  %v2375 = vpop.f32.mrf.mxu0
  %v2376 = vadd.f32 0.0, %v2375
  %v2377 = vpop.f32.mrf.mxu0
  %v2378 = vadd.f32 0.0, %v2377
  %v2379 = vpop.f32.mrf.mxu0
  %v2380 = vpop.f32.mrf.mxu0
  %2381 = vmatprep.mubr.bf16.mxu0 %v1304
  %2382 = vmatmul.mubr.bf16.gmra.mxu0 %v1303
  %v2383 = vpop.f32.mrf.mxu0
  %v2384 = vpop.f32.mrf.mxu0
  %v2385 = vpop.f32.mrf.mxu0
  %v2386 = vpop.f32.mrf.mxu0
  %2387 = vmatprep.mubr.bf16.mxu0 %v1306
  %2388 = vmatmul.mubr.bf16.gmra.mxu0 %v1305
  %v2389 = vpop.f32.mrf.mxu0
  %v2390 = vpop.f32.mrf.mxu0
  %v2391 = vpop.f32.mrf.mxu0
  %v2392 = vadd.f32 0.0, %v2391
  %v2393 = vpop.f32.mrf.mxu0
  %v2394 = vadd.f32 0.0, %v2393
  %2395 = vmatprep.mubr.bf16.mxu0 %v1308
  %2396 = vmatmul.mubr.bf16.gmra.mxu0 %v1307
  %v2397 = vpop.f32.mrf.mxu0
  %v2398 = vadd.f32 0.0, %v2397
  %v2399 = vpop.f32.mrf.mxu0
  %v2400 = vadd.f32 0.0, %v2399
  %v2401 = vpop.f32.mrf.mxu0
  %v2402 = vadd.f32 0.0, %v2401
  %v2403 = vpop.f32.mrf.mxu0
  %v2404 = vadd.f32 0.0, %v2403
  %2405 = vmatprep.mubr.bf16.mxu0 %v1310
  %2406 = vmatmul.mubr.bf16.gmra.mxu0 %v1309
  %v2407 = vpop.f32.mrf.mxu0
  %v2408 = vadd.f32 0.0, %v2407
  %v2409 = vpop.f32.mrf.mxu0
  %v2410 = vadd.f32 0.0, %v2409
  %v2411 = vpop.f32.mrf.mxu0
  %v2412 = vpop.f32.mrf.mxu0
  %2413 = vmatprep.mubr.bf16.mxu0 %v1312
  %2414 = vmatmul.mubr.bf16.gmra.mxu0 %v1311
  %v2415 = vpop.f32.mrf.mxu0
  %v2416 = vpop.f32.mrf.mxu0
  %v2417 = vpop.f32.mrf.mxu0
  %v2418 = vpop.f32.mrf.mxu0
  %2419 = vdwg.mxu0
  %2420 = vmatprep.subr.bf16.mxu0 %v1886
  %2421 = vmatpush1.bf16.msra.mxu0 %v1885
  %2422 = vmatprep.subr.bf16.mxu0 %v1876
  %2423 = vmatpush1.bf16.msra.mxu0 %v1875
  %2424 = vmatprep.subr.bf16.mxu0 %v1866
  %2425 = vmatpush1.bf16.msra.mxu0 %v1865
  %2426 = vmatprep.subr.bf16.mxu0 %v1856
  %2427 = vmatpush1.bf16.msra.mxu0 %v1855
  %2428 = vmatprep.subr.bf16.mxu0 %v1846
  %2429 = vmatpush1.bf16.msra.mxu0 %v1845
  %2430 = vmatprep.subr.bf16.mxu0 %v1836
  %2431 = vmatpush1.bf16.msra.mxu0 %v1835
  %2432 = vmatprep.subr.bf16.mxu0 %v1826
  %2433 = vmatpush1.bf16.msra.mxu0 %v1825
  %2434 = vmatprep.subr.bf16.mxu0 %v1816
  %2435 = vmatpush1.bf16.msra.mxu0 %v1815
  %2436 = vmatprep.subr.bf16.mxu0 %v1966
  %2437 = vmatpush2.bf16.msra.mxu0 %v1965
  %2438 = vmatprep.subr.bf16.mxu0 %v1956
  %2439 = vmatpush2.bf16.msra.mxu0 %v1955
  %2440 = vmatprep.subr.bf16.mxu0 %v1946
  %2441 = vmatpush2.bf16.msra.mxu0 %v1945
  %2442 = vmatprep.subr.bf16.mxu0 %v1936
  %2443 = vmatpush2.bf16.msra.mxu0 %v1935
  %2444 = vmatprep.subr.bf16.mxu0 %v1926
  %2445 = vmatpush2.bf16.msra.mxu0 %v1925
  %2446 = vmatprep.subr.bf16.mxu0 %v1916
  %2447 = vmatpush2.bf16.msra.mxu0 %v1915
  %2448 = vmatprep.subr.bf16.mxu0 %v1906
  %2449 = vmatpush2.bf16.msra.mxu0 %v1905
  %2450 = vmatprep.subr.bf16.mxu0 %v1896
  %2451 = vmatpush2.bf16.msra.mxu0 %v1895
  %2452 = vmatprep.mubr.bf16.mxu0 %v1298
  %2453 = vmatmul.mubr.bf16.gmra.mxu0 %v1297
  %v2454 = vpop.f32.mrf.mxu0
  %v2455 = vpop.f32.mrf.mxu0
  %v2456 = vpop.f32.mrf.mxu0
  %v2457 = vpop.f32.mrf.mxu0
  %2458 = vmatprep.mubr.bf16.mxu0 %v1300
  %2459 = vmatmul.mubr.bf16.gmra.mxu0 %v1299
  %v2460 = vpop.f32.mrf.mxu0
  %v2461 = vadd.f32 0.0, %v2460
  %v2462 = vpop.f32.mrf.mxu0
  %v2463 = vadd.f32 0.0, %v2462
  %v2464 = vpop.f32.mrf.mxu0
  %v2465 = vadd.f32 0.0, %v2464
  %v2466 = vpop.f32.mrf.mxu0
  %v2467 = vadd.f32 0.0, %v2466
  %2468 = vmatprep.mubr.bf16.mxu0 %v1302
  %2469 = vmatmul.mubr.bf16.gmra.mxu0 %v1301
  %v2470 = vpop.f32.mrf.mxu0
  %v2471 = vadd.f32 0.0, %v2470
  %v2472 = vpop.f32.mrf.mxu0
  %v2473 = vadd.f32 0.0, %v2472
  %v2474 = vpop.f32.mrf.mxu0
  %v2475 = vadd.f32 0.0, %v2474
  %v2476 = vpop.f32.mrf.mxu0
  %v2477 = vadd.f32 0.0, %v2476
  %2478 = vmatprep.mubr.bf16.mxu0 %v1304
  %2479 = vmatmul.mubr.bf16.gmra.mxu0 %v1303
  %v2480 = vpop.f32.mrf.mxu0
  %v2481 = vpop.f32.mrf.mxu0
  %v2482 = vpop.f32.mrf.mxu0
  %v2483 = vpop.f32.mrf.mxu0
  %2484 = vmatprep.mubr.bf16.mxu0 %v1306
  %2485 = vmatmul.mubr.bf16.gmra.mxu0 %v1305
  %v2486 = vpop.f32.mrf.mxu0
  %v2487 = vpop.f32.mrf.mxu0
  %v2488 = vpop.f32.mrf.mxu0
  %v2489 = vadd.f32 0.0, %v2488
  %v2490 = vpop.f32.mrf.mxu0
  %v2491 = vadd.f32 0.0, %v2490
  %2492 = vmatprep.mubr.bf16.mxu0 %v1308
  %2493 = vmatmul.mubr.bf16.gmra.mxu0 %v1307
  %v2494 = vpop.f32.mrf.mxu0
  %v2495 = vadd.f32 0.0, %v2494
  %v2496 = vpop.f32.mrf.mxu0
  %v2497 = vadd.f32 0.0, %v2496
  %v2498 = vpop.f32.mrf.mxu0
  %v2499 = vadd.f32 0.0, %v2498
  %v2500 = vpop.f32.mrf.mxu0
  %v2501 = vadd.f32 0.0, %v2500
  %2502 = vmatprep.mubr.bf16.mxu0 %v1310
  %2503 = vmatmul.mubr.bf16.gmra.mxu0 %v1309
  %v2504 = vpop.f32.mrf.mxu0
  %v2505 = vadd.f32 0.0, %v2504
  %v2506 = vpop.f32.mrf.mxu0
  %v2507 = vadd.f32 0.0, %v2506
  %v2508 = vpop.f32.mrf.mxu0
  %v2509 = vpop.f32.mrf.mxu0
  %2510 = vmatprep.mubr.bf16.mxu0 %v1312
  %2511 = vmatmul.mubr.bf16.gmra.mxu0 %v1311
  %v2512 = vpop.f32.mrf.mxu0
  %v2513 = vpop.f32.mrf.mxu0
  %v2514 = vpop.f32.mrf.mxu0
  %v2515 = vpop.f32.mrf.mxu0
  %2516 = vdwg.mxu0
  %2517 = vmatprep.subr.bf16.mxu0 %v1888
  %2518 = vmatpush1.bf16.msra.mxu0 %v1887
  %2519 = vmatprep.subr.bf16.mxu0 %v1878
  %2520 = vmatpush1.bf16.msra.mxu0 %v1877
  %2521 = vmatprep.subr.bf16.mxu0 %v1868
  %2522 = vmatpush1.bf16.msra.mxu0 %v1867
  %2523 = vmatprep.subr.bf16.mxu0 %v1858
  %2524 = vmatpush1.bf16.msra.mxu0 %v1857
  %2525 = vmatprep.subr.bf16.mxu0 %v1848
  %2526 = vmatpush1.bf16.msra.mxu0 %v1847
  %2527 = vmatprep.subr.bf16.mxu0 %v1838
  %2528 = vmatpush1.bf16.msra.mxu0 %v1837
  %2529 = vmatprep.subr.bf16.mxu0 %v1828
  %2530 = vmatpush1.bf16.msra.mxu0 %v1827
  %2531 = vmatprep.subr.bf16.mxu0 %v1818
  %2532 = vmatpush1.bf16.msra.mxu0 %v1817
  %2533 = vmatprep.subr.bf16.mxu0 %v1968
  %2534 = vmatpush2.bf16.msra.mxu0 %v1967
  %2535 = vmatprep.subr.bf16.mxu0 %v1958
  %2536 = vmatpush2.bf16.msra.mxu0 %v1957
  %2537 = vmatprep.subr.bf16.mxu0 %v1948
  %2538 = vmatpush2.bf16.msra.mxu0 %v1947
  %2539 = vmatprep.subr.bf16.mxu0 %v1938
  %2540 = vmatpush2.bf16.msra.mxu0 %v1937
  %2541 = vmatprep.subr.bf16.mxu0 %v1928
  %2542 = vmatpush2.bf16.msra.mxu0 %v1927
  %2543 = vmatprep.subr.bf16.mxu0 %v1918
  %2544 = vmatpush2.bf16.msra.mxu0 %v1917
  %2545 = vmatprep.subr.bf16.mxu0 %v1908
  %2546 = vmatpush2.bf16.msra.mxu0 %v1907
  %2547 = vmatprep.subr.bf16.mxu0 %v1898
  %2548 = vmatpush2.bf16.msra.mxu0 %v1897
  %2549 = vmatprep.mubr.bf16.mxu0 %v1298
  %2550 = vmatmul.mubr.bf16.gmra.mxu0 %v1297
  %v2551 = vpop.f32.mrf.mxu0
  %v2552 = vpop.f32.mrf.mxu0
  %v2553 = vpop.f32.mrf.mxu0
  %v2554 = vpop.f32.mrf.mxu0
  %2555 = vmatprep.mubr.bf16.mxu0 %v1300
  %2556 = vmatmul.mubr.bf16.gmra.mxu0 %v1299
  %v2557 = vpop.f32.mrf.mxu0
  %v2558 = vadd.f32 0.0, %v2557
  %v2559 = vpop.f32.mrf.mxu0
  %v2560 = vadd.f32 0.0, %v2559
  %v2561 = vpop.f32.mrf.mxu0
  %v2562 = vadd.f32 0.0, %v2561
  %v2563 = vpop.f32.mrf.mxu0
  %v2564 = vadd.f32 0.0, %v2563
  %2565 = vmatprep.mubr.bf16.mxu0 %v1302
  %2566 = vmatmul.mubr.bf16.gmra.mxu0 %v1301
  %v2567 = vpop.f32.mrf.mxu0
  %v2568 = vadd.f32 0.0, %v2567
  %v2569 = vpop.f32.mrf.mxu0
  %v2570 = vadd.f32 0.0, %v2569
  %v2571 = vpop.f32.mrf.mxu0
  %v2572 = vadd.f32 0.0, %v2571
  %v2573 = vpop.f32.mrf.mxu0
  %v2574 = vadd.f32 0.0, %v2573
  %2575 = vmatprep.mubr.bf16.mxu0 %v1304
  %2576 = vmatmul.mubr.bf16.gmra.mxu0 %v1303
  %v2577 = vpop.f32.mrf.mxu0
  %v2578 = vpop.f32.mrf.mxu0
  %v2579 = vpop.f32.mrf.mxu0
  %v2580 = vpop.f32.mrf.mxu0
  %2581 = vmatprep.mubr.bf16.mxu0 %v1306
  %2582 = vmatmul.mubr.bf16.gmra.mxu0 %v1305
  %v2583 = vpop.f32.mrf.mxu0
  %v2584 = vpop.f32.mrf.mxu0
  %v2585 = vpop.f32.mrf.mxu0
  %v2586 = vpop.f32.mrf.mxu0
  %2587 = vmatprep.mubr.bf16.mxu0 %v1308
  %2588 = vmatmul.mubr.bf16.gmra.mxu0 %v1307
  %v2589 = vpop.f32.mrf.mxu0
  %v2590 = vadd.f32 0.0, %v2589
  %v2591 = vpop.f32.mrf.mxu0
  %v2592 = vadd.f32 0.0, %v2591
  %v2593 = vpop.f32.mrf.mxu0
  %v2594 = vadd.f32 0.0, %v2593
  %v2595 = vpop.f32.mrf.mxu0
  %v2596 = vadd.f32 0.0, %v2595
  %2597 = vmatprep.mubr.bf16.mxu0 %v1310
  %2598 = vmatmul.mubr.bf16.gmra.mxu0 %v1309
  %v2599 = vpop.f32.mrf.mxu0
  %v2600 = vadd.f32 0.0, %v2599
  %v2601 = vpop.f32.mrf.mxu0
  %v2602 = vadd.f32 0.0, %v2601
  %v2603 = vpop.f32.mrf.mxu0
  %v2604 = vadd.f32 0.0, %v2603
  %v2605 = vpop.f32.mrf.mxu0
  %v2606 = vadd.f32 0.0, %v2605
  %2607 = vmatprep.mubr.bf16.mxu0 %v1312
  %2608 = vmatmul.mubr.bf16.gmra.mxu0 %v1311
  %v2609 = vpop.f32.mrf.mxu0
  %v2610 = vpop.f32.mrf.mxu0
  %v2611 = vpop.f32.mrf.mxu0
  %v2612 = vpop.f32.mrf.mxu0
  %2613 = vdwg.mxu0
  %v2614 = vadd.f32 %v2164, %v2293
  %v2615 = vadd.f32 %v2166, %v2295
  %v2616 = vadd.f32 %v2168, %v2297
  %v2617 = vadd.f32 %v2170, %v2299
  %v2618 = vadd.f32 %v2174, %v2303
  %v2619 = vadd.f32 %v2176, %v2305
  %v2620 = vadd.f32 %v2178, %v2307
  %v2621 = vadd.f32 %v2180, %v2309
  %v2622 = vadd.f32 %v2614, %v2360
  %v2623 = vadd.f32 %v2615, %v2362
  %v2624 = vadd.f32 %v2616, %v2366
  %v2625 = vadd.f32 %v2617, %v2368
  %v2626 = vadd.f32 %v2618, %v2370
  %v2627 = vadd.f32 %v2619, %v2372
  %v2628 = vadd.f32 %v2620, %v2376
  %v2629 = vadd.f32 %v2621, %v2378
  %v2630 = vadd.f32 %v2622, %v2489
  %v2631 = vadd.f32 %v2623, %v2491
  %v2632 = vadd.f32 %v2624, %v2495
  %v2633 = vadd.f32 %v2625, %v2497
  %v2634 = vadd.f32 %v2626, %v2499
  %v2635 = vadd.f32 %v2627, %v2501
  %v2636 = vadd.f32 %v2628, %v2505
  %v2637 = vadd.f32 %v2629, %v2507
  %v2638 = vadd.f32 %v2630, %v2558
  %v2639 = vadd.f32 %v2631, %v2560
  %v2640 = vadd.f32 %v2632, %v2562
  %v2641 = vadd.f32 %v2633, %v2564
  %v2642 = vadd.f32 %v2634, %v2568
  %v2643 = vadd.f32 %v2635, %v2570
  %v2644 = vadd.f32 %v2636, %v2572
  %v2645 = vadd.f32 %v2637, %v2574
  %v2646 = vadd.f32 %v2196, %v2263
  %v2647 = vadd.f32 %v2198, %v2265
  %v2648 = vadd.f32 %v2200, %v2269
  %v2649 = vadd.f32 %v2202, %v2271
  %v2650 = vadd.f32 %v2206, %v2273
  %v2651 = vadd.f32 %v2208, %v2275
  %v2652 = vadd.f32 %v2210, %v2279
  %v2653 = vadd.f32 %v2212, %v2281
  %v2654 = vadd.f32 %v2646, %v2392
  %v2655 = vadd.f32 %v2647, %v2394
  %v2656 = vadd.f32 %v2648, %v2398
  %v2657 = vadd.f32 %v2649, %v2400
  %v2658 = vadd.f32 %v2650, %v2402
  %v2659 = vadd.f32 %v2651, %v2404
  %v2660 = vadd.f32 %v2652, %v2408
  %v2661 = vadd.f32 %v2653, %v2410
  %v2662 = vadd.f32 %v2654, %v2461
  %v2663 = vadd.f32 %v2655, %v2463
  %v2664 = vadd.f32 %v2656, %v2465
  %v2665 = vadd.f32 %v2657, %v2467
  %v2666 = vadd.f32 %v2658, %v2471
  %v2667 = vadd.f32 %v2659, %v2473
  %v2668 = vadd.f32 %v2660, %v2475
  %v2669 = vadd.f32 %v2661, %v2477
  %v2670 = vadd.f32 %v2662, %v2590
  %v2671 = vadd.f32 %v2663, %v2592
  %v2672 = vadd.f32 %v2664, %v2594
  %v2673 = vadd.f32 %v2665, %v2596
  %v2674 = vadd.f32 %v2666, %v2600
  %v2675 = vadd.f32 %v2667, %v2602
  %v2676 = vadd.f32 %v2668, %v2604
  %v2677 = vadd.f32 %v2669, %v2606
  %v2678 = vmax.f32 %v2638, %v2670
  %v2679 = vmax.f32 %v2639, %v2671
  %v2680 = vmax.f32 %v2640, %v2672
  %v2681 = vmax.f32 %v2641, %v2673
  %v2682 = vmax.f32 %v2642, %v2674
  %v2683 = vmax.f32 %v2643, %v2675
  %v2684 = vmax.f32 %v2644, %v2676
  %v2685 = vmax.f32 %v2645, %v2677
  %v2686 = vmax.f32 %v2678, %v2679
  %v2687 = vmax.f32 %v2680, %v2681
  %v2688 = vmax.f32 %v2682, %v2683
  %v2689 = vmax.f32 %v2684, %v2685
  %v2690 = vld [vmem:[%s4] sm:$0x1]
  %v2692 = vlaneseq
  %v2693 = vshrl.u32 %v2692, 7
  %v2694 = vsub.s32 0, %v2693
  %v2695 = vrot.slane %v2690, %v2694
  %v2697 = vadd.f32 %v2686, %v2695
  %v2698 = vadd.f32 %v2687, %v2695
  %v2699 = vadd.f32 %v2688, %v2695
  %v2700 = vadd.f32 %v2689, %v2695
  %v2701 = vmax.f32 %v2697, 0.0
  %v2702 = vmax.f32 %v2698, 0.0
  %v2703 = vmax.f32 %v2699, 0.0
  %v2704 = vmax.f32 %v2700, 0.0
  %v2705 = vpack.c.bf16 %v2701, %v2701
  %v2706 = vpack.c.bf16 %v2702, %v2702
  %v2707 = vpack.c.bf16 %v2703, %v2703
  %v2708 = vpack.c.bf16 %v2704, %v2704
  %v2709 = vld [vmem:[%s5] sm:$0xf]
  %v2710 = vld [vmem:[%s5 + $0x4] sm:$0xf]
  %v2711 = vld [vmem:[%s5 + $0x8] sm:$0xf]
  %v2712 = vld [vmem:[%s5 + $0xc] sm:$0xf]
  %v2713 = vld [vmem:[%s5 + $0x10] sm:$0xf]
  %v2714 = vld [vmem:[%s5 + $0x14] sm:$0xf]
  %v2715 = vld [vmem:[%s5 + $0x18] sm:$0xf]
  %v2716 = vld [vmem:[%s5 + $0x1c] sm:$0xf]
  %v2717 = vld [vmem:[%s5 + $0x20] sm:$0xf]
  %v2718 = vld [vmem:[%s5 + $0x24] sm:$0xf]
  %v2719 = vld [vmem:[%s5 + $0x28] sm:$0xf]
  %v2720 = vld [vmem:[%s5 + $0x2c] sm:$0xf]
  %v2721 = vld [vmem:[%s5 + $0x30] sm:$0xf]
  %v2722 = vld [vmem:[%s5 + $0x34] sm:$0xf]
  %v2723 = vld [vmem:[%s5 + $0x38] sm:$0xf]
  %v2724 = vld [vmem:[%s5 + $0x3c] sm:$0xf]
  %s2725 = scalar_lea.vmem %s5, 64
  %v2726 = vld [vmem:[%s2725] sm:$0xf]
  %v2727 = vld [vmem:[%s2725 + $0x4] sm:$0xf]
  %v2728 = vld [vmem:[%s2725 + $0x8] sm:$0xf]
  %v2729 = vld [vmem:[%s2725 + $0xc] sm:$0xf]
  %v2730 = vld [vmem:[%s2725 + $0x10] sm:$0xf]
  %v2731 = vld [vmem:[%s2725 + $0x14] sm:$0xf]
  %v2732 = vld [vmem:[%s2725 + $0x18] sm:$0xf]
  %v2733 = vld [vmem:[%s2725 + $0x1c] sm:$0xf]
  %v2734 = vld [vmem:[%s2725 + $0x20] sm:$0xf]
  %v2735 = vld [vmem:[%s2725 + $0x24] sm:$0xf]
  %v2736 = vld [vmem:[%s2725 + $0x28] sm:$0xf]
  %v2737 = vld [vmem:[%s2725 + $0x2c] sm:$0xf]
  %v2738 = vld [vmem:[%s2725 + $0x30] sm:$0xf]
  %v2739 = vld [vmem:[%s2725 + $0x34] sm:$0xf]
  %v2740 = vld [vmem:[%s2725 + $0x38] sm:$0xf]
  %v2741 = vld [vmem:[%s2725 + $0x3c] sm:$0xf]
  %v2758 = vunpack.c.l.b16 %v2726
  %v2759 = vunpack.c.l.b16 %v2727
  %v2760 = vunpack.c.l.b16 %v2728
  %v2761 = vunpack.c.l.b16 %v2729
  %v2762 = vunpack.c.l.b16 %v2730
  %v2763 = vunpack.c.l.b16 %v2731
  %v2764 = vunpack.c.l.b16 %v2732
  %v2765 = vunpack.c.l.b16 %v2733
  %v2766 = vunpack.c.l.b16 %v2734
  %v2767 = vunpack.c.l.b16 %v2735
  %v2768 = vunpack.c.l.b16 %v2736
  %v2769 = vunpack.c.l.b16 %v2737
  %v2770 = vunpack.c.l.b16 %v2738
  %v2771 = vunpack.c.l.b16 %v2739
  %v2772 = vunpack.c.l.b16 %v2740
  %v2773 = vunpack.c.l.b16 %v2741
  %v2774 = vpack.c.b16 %v2759, %v2758
  %v2775 = vpack.c.b16 %v2761, %v2760
  %v2776 = vpack.c.b16 %v2763, %v2762
  %v2777 = vpack.c.b16 %v2765, %v2764
  %v2778 = vpack.c.b16 %v2767, %v2766
  %v2779 = vpack.c.b16 %v2769, %v2768
  %v2780 = vpack.c.b16 %v2771, %v2770
  %v2781 = vpack.c.b16 %v2773, %v2772
  %2790 = vmatprep.subr.bf16.mxu0 0
  %2791 = vmatpush1.bf16.msra.mxu0 %v2781
  %2792 = vmatprep.subr.bf16.mxu0 0
  %2793 = vmatpush1.bf16.msra.mxu0 %v2780
  %2794 = vmatprep.subr.bf16.mxu0 0
  %2795 = vmatpush1.bf16.msra.mxu0 %v2779
  %2796 = vmatprep.subr.bf16.mxu0 0
  %2797 = vmatpush1.bf16.msra.mxu0 %v2778
  %2798 = vmatprep.subr.bf16.mxu0 0
  %2799 = vmatpush1.bf16.msra.mxu0 %v2777
  %2800 = vmatprep.subr.bf16.mxu0 0
  %2801 = vmatpush1.bf16.msra.mxu0 %v2776
  %2802 = vmatprep.subr.bf16.mxu0 0
  %2803 = vmatpush1.bf16.msra.mxu0 %v2775
  %2804 = vmatprep.subr.bf16.mxu0 0
  %2805 = vmatpush1.bf16.msra.mxu0 %v2774
  %2806 = vmatprep.subr.bf16.mxu0 0
  %2807 = vmatpush2.bf16.msra.mxu0 0
  %2808 = vmatprep.subr.bf16.mxu0 0
  %2809 = vmatpush2.bf16.msra.mxu0 0
  %2810 = vmatprep.subr.bf16.mxu0 0
  %2811 = vmatpush2.bf16.msra.mxu0 0
  %2812 = vmatprep.subr.bf16.mxu0 0
  %2813 = vmatpush2.bf16.msra.mxu0 0
  %2814 = vmatprep.subr.bf16.mxu0 0
  %2815 = vmatpush2.bf16.msra.mxu0 0
  %2816 = vmatprep.subr.bf16.mxu0 0
  %2817 = vmatpush2.bf16.msra.mxu0 0
  %2818 = vmatprep.subr.bf16.mxu0 0
  %2819 = vmatpush2.bf16.msra.mxu0 0
  %2820 = vmatprep.subr.bf16.mxu0 0
  %2821 = vmatpush2.bf16.msra.mxu0 0
  %2822 = vmatprep.mubr.bf16.mxu0 0
  %2823 = vmatmul.mubr.bf16.gmra.mxu0 %v2706
  %v2824 = vpop.f32.mrf.mxu0
  %v2825 = vadd.f32 0.0, %v2824
  %v2826 = vpop.f32.mrf.mxu0
  %v2827 = vpop.f32.mrf.mxu0
  %v2828 = vpop.f32.mrf.mxu0
  %2829 = vdwg.mxu0
  %v2846 = vunpack.c.l.b16 %v2709
  %v2847 = vunpack.c.l.b16 %v2710
  %v2848 = vunpack.c.l.b16 %v2711
  %v2849 = vunpack.c.l.b16 %v2712
  %v2850 = vunpack.c.l.b16 %v2713
  %v2851 = vunpack.c.l.b16 %v2714
  %v2852 = vunpack.c.l.b16 %v2715
  %v2853 = vunpack.c.l.b16 %v2716
  %v2854 = vunpack.c.l.b16 %v2717
  %v2855 = vunpack.c.l.b16 %v2718
  %v2856 = vunpack.c.l.b16 %v2719
  %v2857 = vunpack.c.l.b16 %v2720
  %v2858 = vunpack.c.l.b16 %v2721
  %v2859 = vunpack.c.l.b16 %v2722
  %v2860 = vunpack.c.l.b16 %v2723
  %v2861 = vunpack.c.l.b16 %v2724
  %v2862 = vpack.c.b16 %v2847, %v2846
  %v2863 = vpack.c.b16 %v2849, %v2848
  %v2864 = vpack.c.b16 %v2851, %v2850
  %v2865 = vpack.c.b16 %v2853, %v2852
  %v2866 = vpack.c.b16 %v2855, %v2854
  %v2867 = vpack.c.b16 %v2857, %v2856
  %v2868 = vpack.c.b16 %v2859, %v2858
  %v2869 = vpack.c.b16 %v2861, %v2860
  %2878 = vmatprep.subr.bf16.mxu0 0
  %2879 = vmatpush1.bf16.msra.mxu0 %v2869
  %2880 = vmatprep.subr.bf16.mxu0 0
  %2881 = vmatpush1.bf16.msra.mxu0 %v2868
  %2882 = vmatprep.subr.bf16.mxu0 0
  %2883 = vmatpush1.bf16.msra.mxu0 %v2867
  %2884 = vmatprep.subr.bf16.mxu0 0
  %2885 = vmatpush1.bf16.msra.mxu0 %v2866
  %2886 = vmatprep.subr.bf16.mxu0 0
  %2887 = vmatpush1.bf16.msra.mxu0 %v2865
  %2888 = vmatprep.subr.bf16.mxu0 0
  %2889 = vmatpush1.bf16.msra.mxu0 %v2864
  %2890 = vmatprep.subr.bf16.mxu0 0
  %2891 = vmatpush1.bf16.msra.mxu0 %v2863
  %2892 = vmatprep.subr.bf16.mxu0 0
  %2893 = vmatpush1.bf16.msra.mxu0 %v2862
  %2894 = vmatprep.subr.bf16.mxu0 0
  %2895 = vmatpush2.bf16.msra.mxu0 0
  %2896 = vmatprep.subr.bf16.mxu0 0
  %2897 = vmatpush2.bf16.msra.mxu0 0
  %2898 = vmatprep.subr.bf16.mxu0 0
  %2899 = vmatpush2.bf16.msra.mxu0 0
  %2900 = vmatprep.subr.bf16.mxu0 0
  %2901 = vmatpush2.bf16.msra.mxu0 0
  %2902 = vmatprep.subr.bf16.mxu0 0
  %2903 = vmatpush2.bf16.msra.mxu0 0
  %2904 = vmatprep.subr.bf16.mxu0 0
  %2905 = vmatpush2.bf16.msra.mxu0 0
  %2906 = vmatprep.subr.bf16.mxu0 0
  %2907 = vmatpush2.bf16.msra.mxu0 0
  %2908 = vmatprep.subr.bf16.mxu0 0
  %2909 = vmatpush2.bf16.msra.mxu0 0
  %2910 = vmatprep.mubr.bf16.mxu0 0
  %2911 = vmatmul.mubr.bf16.gmra.mxu0 %v2705
  %v2912 = vpop.f32.mrf.mxu0
  %v2913 = vadd.f32 %v2825, %v2912
  %v2914 = vpop.f32.mrf.mxu0
  %v2915 = vpop.f32.mrf.mxu0
  %v2916 = vpop.f32.mrf.mxu0
  %2917 = vdwg.mxu0
  %s2918 = scalar_lea.vmem %s5, 128
  %v2919 = vld [vmem:[%s2918] sm:$0xf]
  %v2920 = vld [vmem:[%s2918 + $0x4] sm:$0xf]
  %v2921 = vld [vmem:[%s2918 + $0x8] sm:$0xf]
  %v2922 = vld [vmem:[%s2918 + $0xc] sm:$0xf]
  %v2923 = vld [vmem:[%s2918 + $0x10] sm:$0xf]
  %v2924 = vld [vmem:[%s2918 + $0x14] sm:$0xf]
  %v2925 = vld [vmem:[%s2918 + $0x18] sm:$0xf]
  %v2926 = vld [vmem:[%s2918 + $0x1c] sm:$0xf]
  %v2927 = vld [vmem:[%s2918 + $0x20] sm:$0xf]
  %v2928 = vld [vmem:[%s2918 + $0x24] sm:$0xf]
  %v2929 = vld [vmem:[%s2918 + $0x28] sm:$0xf]
  %v2930 = vld [vmem:[%s2918 + $0x2c] sm:$0xf]
  %v2931 = vld [vmem:[%s2918 + $0x30] sm:$0xf]
  %v2932 = vld [vmem:[%s2918 + $0x34] sm:$0xf]
  %v2933 = vld [vmem:[%s2918 + $0x38] sm:$0xf]
  %v2934 = vld [vmem:[%s2918 + $0x3c] sm:$0xf]
  %v2951 = vunpack.c.l.b16 %v2919
  %v2952 = vunpack.c.l.b16 %v2920
  %v2953 = vunpack.c.l.b16 %v2921
  %v2954 = vunpack.c.l.b16 %v2922
  %v2955 = vunpack.c.l.b16 %v2923
  %v2956 = vunpack.c.l.b16 %v2924
  %v2957 = vunpack.c.l.b16 %v2925
  %v2958 = vunpack.c.l.b16 %v2926
  %v2959 = vunpack.c.l.b16 %v2927
  %v2960 = vunpack.c.l.b16 %v2928
  %v2961 = vunpack.c.l.b16 %v2929
  %v2962 = vunpack.c.l.b16 %v2930
  %v2963 = vunpack.c.l.b16 %v2931
  %v2964 = vunpack.c.l.b16 %v2932
  %v2965 = vunpack.c.l.b16 %v2933
  %v2966 = vunpack.c.l.b16 %v2934
  %v2967 = vpack.c.b16 %v2952, %v2951
  %v2968 = vpack.c.b16 %v2954, %v2953
  %v2969 = vpack.c.b16 %v2956, %v2955
  %v2970 = vpack.c.b16 %v2958, %v2957
  %v2971 = vpack.c.b16 %v2960, %v2959
  %v2972 = vpack.c.b16 %v2962, %v2961
  %v2973 = vpack.c.b16 %v2964, %v2963
  %v2974 = vpack.c.b16 %v2966, %v2965
  %2983 = vmatprep.subr.bf16.mxu0 0
  %2984 = vmatpush1.bf16.msra.mxu0 %v2974
  %2985 = vmatprep.subr.bf16.mxu0 0
  %2986 = vmatpush1.bf16.msra.mxu0 %v2973
  %2987 = vmatprep.subr.bf16.mxu0 0
  %2988 = vmatpush1.bf16.msra.mxu0 %v2972
  %2989 = vmatprep.subr.bf16.mxu0 0
  %2990 = vmatpush1.bf16.msra.mxu0 %v2971
  %2991 = vmatprep.subr.bf16.mxu0 0
  %2992 = vmatpush1.bf16.msra.mxu0 %v2970
  %2993 = vmatprep.subr.bf16.mxu0 0
  %2994 = vmatpush1.bf16.msra.mxu0 %v2969
  %2995 = vmatprep.subr.bf16.mxu0 0
  %2996 = vmatpush1.bf16.msra.mxu0 %v2968
  %2997 = vmatprep.subr.bf16.mxu0 0
  %2998 = vmatpush1.bf16.msra.mxu0 %v2967
  %2999 = vmatprep.subr.bf16.mxu0 0
  %3000 = vmatpush2.bf16.msra.mxu0 0
  %3001 = vmatprep.subr.bf16.mxu0 0
  %3002 = vmatpush2.bf16.msra.mxu0 0
  %3003 = vmatprep.subr.bf16.mxu0 0
  %3004 = vmatpush2.bf16.msra.mxu0 0
  %3005 = vmatprep.subr.bf16.mxu0 0
  %3006 = vmatpush2.bf16.msra.mxu0 0
  %3007 = vmatprep.subr.bf16.mxu0 0
  %3008 = vmatpush2.bf16.msra.mxu0 0
  %3009 = vmatprep.subr.bf16.mxu0 0
  %3010 = vmatpush2.bf16.msra.mxu0 0
  %3011 = vmatprep.subr.bf16.mxu0 0
  %3012 = vmatpush2.bf16.msra.mxu0 0
  %3013 = vmatprep.subr.bf16.mxu0 0
  %3014 = vmatpush2.bf16.msra.mxu0 0
  %3015 = vmatprep.mubr.bf16.mxu0 0
  %3016 = vmatmul.mubr.bf16.gmra.mxu0 %v2707
  %v3017 = vpop.f32.mrf.mxu0
  %v3018 = vadd.f32 0.0, %v3017
  %v3019 = vpop.f32.mrf.mxu0
  %v3020 = vpop.f32.mrf.mxu0
  %v3021 = vpop.f32.mrf.mxu0
  %3022 = vdwg.mxu0
  %v3023 = vadd.f32 %v2913, %v3018
  %s3024 = scalar_lea.vmem %s5, 192
  %v3025 = vld [vmem:[%s3024] sm:$0xf]
  %v3026 = vld [vmem:[%s3024 + $0x4] sm:$0xf]
  %v3027 = vld [vmem:[%s3024 + $0x8] sm:$0xf]
  %v3028 = vld [vmem:[%s3024 + $0xc] sm:$0xf]
  %v3029 = vld [vmem:[%s3024 + $0x10] sm:$0xf]
  %v3030 = vld [vmem:[%s3024 + $0x14] sm:$0xf]
  %v3031 = vld [vmem:[%s3024 + $0x18] sm:$0xf]
  %v3032 = vld [vmem:[%s3024 + $0x1c] sm:$0xf]
  %v3033 = vld [vmem:[%s3024 + $0x20] sm:$0xf]
  %v3034 = vld [vmem:[%s3024 + $0x24] sm:$0xf]
  %v3035 = vld [vmem:[%s3024 + $0x28] sm:$0xf]
  %v3036 = vld [vmem:[%s3024 + $0x2c] sm:$0xf]
  %v3037 = vld [vmem:[%s3024 + $0x30] sm:$0xf]
  %v3038 = vld [vmem:[%s3024 + $0x34] sm:$0xf]
  %v3039 = vld [vmem:[%s3024 + $0x38] sm:$0xf]
  %v3040 = vld [vmem:[%s3024 + $0x3c] sm:$0xf]
  %v3057 = vunpack.c.l.b16 %v3025
  %v3058 = vunpack.c.l.b16 %v3026
  %v3059 = vunpack.c.l.b16 %v3027
  %v3060 = vunpack.c.l.b16 %v3028
  %v3061 = vunpack.c.l.b16 %v3029
  %v3062 = vunpack.c.l.b16 %v3030
  %v3063 = vunpack.c.l.b16 %v3031
  %v3064 = vunpack.c.l.b16 %v3032
  %v3065 = vunpack.c.l.b16 %v3033
  %v3066 = vunpack.c.l.b16 %v3034
  %v3067 = vunpack.c.l.b16 %v3035
  %v3068 = vunpack.c.l.b16 %v3036
  %v3069 = vunpack.c.l.b16 %v3037
  %v3070 = vunpack.c.l.b16 %v3038
  %v3071 = vunpack.c.l.b16 %v3039
  %v3072 = vunpack.c.l.b16 %v3040
  %v3073 = vpack.c.b16 %v3058, %v3057
  %v3074 = vpack.c.b16 %v3060, %v3059
  %v3075 = vpack.c.b16 %v3062, %v3061
  %v3076 = vpack.c.b16 %v3064, %v3063
  %v3077 = vpack.c.b16 %v3066, %v3065
  %v3078 = vpack.c.b16 %v3068, %v3067
  %v3079 = vpack.c.b16 %v3070, %v3069
  %v3080 = vpack.c.b16 %v3072, %v3071
  %3089 = vmatprep.subr.bf16.mxu0 0
  %3090 = vmatpush1.bf16.msra.mxu0 %v3080
  %3091 = vmatprep.subr.bf16.mxu0 0
  %3092 = vmatpush1.bf16.msra.mxu0 %v3079
  %3093 = vmatprep.subr.bf16.mxu0 0
  %3094 = vmatpush1.bf16.msra.mxu0 %v3078
  %3095 = vmatprep.subr.bf16.mxu0 0
  %3096 = vmatpush1.bf16.msra.mxu0 %v3077
  %3097 = vmatprep.subr.bf16.mxu0 0
  %3098 = vmatpush1.bf16.msra.mxu0 %v3076
  %3099 = vmatprep.subr.bf16.mxu0 0
  %3100 = vmatpush1.bf16.msra.mxu0 %v3075
  %3101 = vmatprep.subr.bf16.mxu0 0
  %3102 = vmatpush1.bf16.msra.mxu0 %v3074
  %3103 = vmatprep.subr.bf16.mxu0 0
  %3104 = vmatpush1.bf16.msra.mxu0 %v3073
  %3105 = vmatprep.subr.bf16.mxu0 0
  %3106 = vmatpush2.bf16.msra.mxu0 0
  %3107 = vmatprep.subr.bf16.mxu0 0
  %3108 = vmatpush2.bf16.msra.mxu0 0
  %3109 = vmatprep.subr.bf16.mxu0 0
  %3110 = vmatpush2.bf16.msra.mxu0 0
  %3111 = vmatprep.subr.bf16.mxu0 0
  %3112 = vmatpush2.bf16.msra.mxu0 0
  %3113 = vmatprep.subr.bf16.mxu0 0
  %3114 = vmatpush2.bf16.msra.mxu0 0
  %3115 = vmatprep.subr.bf16.mxu0 0
  %3116 = vmatpush2.bf16.msra.mxu0 0
  %3117 = vmatprep.subr.bf16.mxu0 0
  %3118 = vmatpush2.bf16.msra.mxu0 0
  %3119 = vmatprep.subr.bf16.mxu0 0
  %3120 = vmatpush2.bf16.msra.mxu0 0
  %3121 = vmatprep.mubr.bf16.mxu0 0
  %3122 = vmatmul.mubr.bf16.gmra.mxu0 %v2708
  %v3123 = vpop.f32.mrf.mxu0
  %v3124 = vadd.f32 0.0, %v3123
  %v3125 = vpop.f32.mrf.mxu0
  %v3126 = vpop.f32.mrf.mxu0
  %v3127 = vpop.f32.mrf.mxu0
  %3128 = vdwg.mxu0
  %v3129 = vadd.f32 %v3023, %v3124
  %v3130 = vld [vmem:[%s6] sm:$0x1]
  %v3132 = vlaneseq
  %v3133 = vshrl.u32 %v3132, 7
  %v3134 = vsub.s32 0, %v3133
  %v3135 = vrot.slane %v3130, %v3134
  %v3137 = vadd.f32 %v3129, %v3135
  %v3138 = vmax.f32 %v3137, 0.0
  %v3139 = vpack.c.bf16 %v3138, %v3138
  %v3140 = vld [vmem:[%s7] sm:$0xf]
  %v3141 = vld [vmem:[%s7 + $0x4] sm:$0xf]
  %v3142 = vld [vmem:[%s7 + $0x8] sm:$0xf]
  %v3143 = vld [vmem:[%s7 + $0xc] sm:$0xf]
  %v3144 = vld [vmem:[%s7 + $0x10] sm:$0xf]
  %v3145 = vld [vmem:[%s7 + $0x14] sm:$0xf]
  %v3146 = vld [vmem:[%s7 + $0x18] sm:$0xf]
  %v3147 = vld [vmem:[%s7 + $0x1c] sm:$0xf]
  %v3148 = vld [vmem:[%s7 + $0x20] sm:$0xf]
  %v3149 = vld [vmem:[%s7 + $0x24] sm:$0xf]
  %v3150 = vld [vmem:[%s7 + $0x28] sm:$0xf]
  %v3151 = vld [vmem:[%s7 + $0x2c] sm:$0xf]
  %v3152 = vld [vmem:[%s7 + $0x30] sm:$0xf]
  %v3153 = vld [vmem:[%s7 + $0x34] sm:$0xf]
  %v3154 = vld [vmem:[%s7 + $0x38] sm:$0xf]
  %v3155 = vld [vmem:[%s7 + $0x3c] sm:$0xf]
  %v3156 = vld [vmem:[%s8] sm:$0x1]
  %v3158 = vlaneseq
  %v3159 = vshrl.u32 %v3158, 7
  %v3160 = vsub.s32 0, %v3159
  %v3161 = vrot.slane %v3156, %v3160
  %v3179 = vunpack.c.l.b16 %v3140
  %v3180 = vunpack.c.l.b16 %v3141
  %v3181 = vunpack.c.l.b16 %v3142
  %v3182 = vunpack.c.l.b16 %v3143
  %v3183 = vunpack.c.l.b16 %v3144
  %v3184 = vunpack.c.l.b16 %v3145
  %v3185 = vunpack.c.l.b16 %v3146
  %v3186 = vunpack.c.l.b16 %v3147
  %v3187 = vunpack.c.l.b16 %v3148
  %v3188 = vunpack.c.l.b16 %v3149
  %v3189 = vunpack.c.l.b16 %v3150
  %v3190 = vunpack.c.l.b16 %v3151
  %v3191 = vunpack.c.l.b16 %v3152
  %v3192 = vunpack.c.l.b16 %v3153
  %v3193 = vunpack.c.l.b16 %v3154
  %v3194 = vunpack.c.l.b16 %v3155
  %v3195 = vpack.c.b16 %v3180, %v3179
  %v3196 = vpack.c.b16 %v3182, %v3181
  %v3197 = vpack.c.b16 %v3184, %v3183
  %v3198 = vpack.c.b16 %v3186, %v3185
  %v3199 = vpack.c.b16 %v3188, %v3187
  %v3200 = vpack.c.b16 %v3190, %v3189
  %v3201 = vpack.c.b16 %v3192, %v3191
  %v3202 = vpack.c.b16 %v3194, %v3193
  %3211 = vmatprep.subr.bf16.mxu0 0
  %3212 = vmatpush1.bf16.msra.mxu0 %v3202
  %3213 = vmatprep.subr.bf16.mxu0 0
  %3214 = vmatpush1.bf16.msra.mxu0 %v3201
  %3215 = vmatprep.subr.bf16.mxu0 0
  %3216 = vmatpush1.bf16.msra.mxu0 %v3200
  %3217 = vmatprep.subr.bf16.mxu0 0
  %3218 = vmatpush1.bf16.msra.mxu0 %v3199
  %3219 = vmatprep.subr.bf16.mxu0 0
  %3220 = vmatpush1.bf16.msra.mxu0 %v3198
  %3221 = vmatprep.subr.bf16.mxu0 0
  %3222 = vmatpush1.bf16.msra.mxu0 %v3197
  %3223 = vmatprep.subr.bf16.mxu0 0
  %3224 = vmatpush1.bf16.msra.mxu0 %v3196
  %3225 = vmatprep.subr.bf16.mxu0 0
  %3226 = vmatpush1.bf16.msra.mxu0 %v3195
  %3227 = vmatprep.subr.bf16.mxu0 0
  %3228 = vmatpush2.bf16.msra.mxu0 0
  %3229 = vmatprep.subr.bf16.mxu0 0
  %3230 = vmatpush2.bf16.msra.mxu0 0
  %3231 = vmatprep.subr.bf16.mxu0 0
  %3232 = vmatpush2.bf16.msra.mxu0 0
  %3233 = vmatprep.subr.bf16.mxu0 0
  %3234 = vmatpush2.bf16.msra.mxu0 0
  %3235 = vmatprep.subr.bf16.mxu0 0
  %3236 = vmatpush2.bf16.msra.mxu0 0
  %3237 = vmatprep.subr.bf16.mxu0 0
  %3238 = vmatpush2.bf16.msra.mxu0 0
  %3239 = vmatprep.subr.bf16.mxu0 0
  %3240 = vmatpush2.bf16.msra.mxu0 0
  %3241 = vmatprep.subr.bf16.mxu0 0
  %3242 = vmatpush2.bf16.msra.mxu0 0
  %3243 = vmatprep.mubr.bf16.mxu0 0
  %3244 = vmatmul.mubr.bf16.gmra.mxu0 %v3139
  %v3245 = vpop.f32.mrf.mxu0
  %v3246 = vadd.f32 %v3161, %v3245
  %v3247 = vpop.f32.mrf.mxu0
  %v3248 = vpop.f32.mrf.mxu0
  %v3249 = vpop.f32.mrf.mxu0
  %3250 = vdwg.mxu0
  %3251 = vmax.xlane.f32.xlu0 %v3246
  %v3252 = vpop.xlane.xlu0 %3251
  %v3253 = vsub.f32 %v3246, %v3252
  %v3254 = vmul.f32 %v3253, 1.442695
  %v3255 = vpow.pop %v3254
  %3256 = vadd.xlane.f32.xlu0 %v3255
  %v3257 = vpop.xlane.xlu0 %3256
  %v3258 = vlog2.pop %v3257
  %v3259 = vmul.f32 %v3258, 0.6931472
  %v3260 = vsub.f32 %v3253, %v3259
  %3261 = vst [vmem:[%s9] sm:$0xff] %v3260
  // Predicated region
  $region38: #{smallnet_forward.1} parent=0 // pred_check
    _
  $region39: #{smallnet_forward.1} parent=0 // pred_check_branch
    %3263 = sbr.rel (0) target = $region41
  $region40: #{smallnet_forward.1} parent=0 // pred_region
    _
  $region41: #{smallnet_forward.1} parent=0 // pred_fallthru
    _
  // Predicated region
  $region42: #{smallnet_forward.1} parent=0 // pred_check
    _
  $region43: #{smallnet_forward.1} parent=0 // pred_check_branch
    %3265 = sbr.rel (0) target = $region45
  $region44: #{smallnet_forward.1} parent=0 // pred_region
    _
  $region45: #{smallnet_forward.1} parent=0 // pred_fallthru
    _

</llo_original>
